<compile_context>
chip_gen: v7x
topology: tpu7x:2x2x1
jax: 0.10.0
libtpu: 0.0.40
codegen_flags: <defaults>
</compile_context>

<pallas_src>
import jax
import jax.numpy as jnp
from jax.experimental import pallas as pl
from jax.experimental.pallas import tpu as pltpu  # noqa: F401

EPS = 1e-3  # matches BatchNorm2d(eps=0.001) in the PyTorch module


def _fused_kernel(x118_ref, x110_ref, gb1_ref, w_ref, gb2_ref, out_ref):
    x = x118_ref[...]                       # (Cin, P) f32
    r = x110_ref[...]                       # (Cin, P) f32
    inv_p = 1.0 / x.shape[1]                # static python float (true pixel count)

    g1 = gb1_ref[:, 0:1]                    # (Cin, 1)
    b1 = gb1_ref[:, 1:2]                    # (Cin, 1)

    # ---- BatchNorm2d(64), training mode, two-pass stats --------------------
    mean1 = jnp.sum(x, axis=1, keepdims=True) * inv_p          # (Cin, 1)
    d1 = x - mean1
    var1 = jnp.sum(d1 * d1, axis=1, keepdims=True) * inv_p     # >= 0 by construction
    scale1 = g1 * jax.lax.rsqrt(var1 + EPS)                    # (Cin, 1)
    shift1 = b1 - mean1 * scale1                               # (Cin, 1)

    # ---- BN1 apply + residual add: one mul + two adds per big element ------
    z = x * scale1 + shift1 + r                                # (Cin, P)

    # ---- 1x1 conv == matmul on the MXU (bf16 operands, f32 accumulate) -----
    y = jnp.dot(w_ref[...], z.astype(jnp.bfloat16),
                preferred_element_type=jnp.float32)            # (Cout, P) f32

    g2 = gb2_ref[:, 0:1]                    # (Cout, 1)
    b2 = gb2_ref[:, 1:2]                    # (Cout, 1)

    # ---- BatchNorm2d(384), training mode, two-pass stats -------------------
    mean2 = jnp.sum(y, axis=1, keepdims=True) * inv_p          # (Cout, 1)
    d2 = y - mean2
    var2 = jnp.sum(d2 * d2, axis=1, keepdims=True) * inv_p
    scale2 = g2 * jax.lax.rsqrt(var2 + EPS)                    # (Cout, 1)
    shift2 = b2 - mean2 * scale2                               # (Cout, 1)

    out_ref[...] = (y * scale2 + shift2).astype(out_ref.dtype)


def fused_bn_add_conv_bn(x118_nchw, x110_nchw, gamma1, beta1, w_oi, gamma2,
                         beta2, *, out_dtype=jnp.float32):
    """x118_nchw, x110_nchw: (N, 64, H, W) f32.  Returns (N, 384, H, W) out_dtype.

    Pass out_dtype=jnp.bfloat16 if the consumer tolerates bf16: it halves the
    dominant (Cout, P) output store (BN2 has just renormalized, so rounding is
    benign).
    """
    N, C_in, H, W = x118_nchw.shape
    C_out = w_oi.shape[0]
    P = N * H * W

    if N == 1:
        # Pure reshapes: no transpose, no extra HBM traffic.
        x118 = x118_nchw.reshape(C_in, P)
        x110 = x110_nchw.reshape(C_in, P)
    else:
        # TODO(synk): N > 1 reintroduces an NCHW -> (C, N*H*W) transpose here.
        x118 = jnp.transpose(x118_nchw, (1, 0, 2, 3)).reshape(C_in, P)
        x110 = jnp.transpose(x110_nchw, (1, 0, 2, 3)).reshape(C_in, P)

    # (Cout, Cin, 1, 1) -> (Cout, Cin): already the right matmul orientation.
    w = w_oi.reshape(C_out, C_in).astype(jnp.bfloat16)

    # Merge per-channel BN params into one operand per BN (fewer tiny DMAs).
    gb1 = jnp.stack([gamma1, beta1], axis=1).astype(jnp.float32)   # (Cin, 2)
    gb2 = jnp.stack([gamma2, beta2], axis=1).astype(jnp.float32)   # (Cout, 2)

    # Advisory cost estimate so XLA schedules/overlaps around this call.
    out_bytes = C_out * P * jnp.dtype(out_dtype).itemsize
    bytes_accessed = (2 * C_in * P * 4            # two f32 activation inputs
                      + C_out * C_in * 2          # bf16 weight
                      + (C_in + C_out) * 2 * 4    # BN params
                      + out_bytes)                # output
    cost = pl.CostEstimate(
        flops=2 * C_out * C_in * P + 8 * C_in * P + 8 * C_out * P,
        transcendentals=C_in + C_out,             # rsqrt per channel
        bytes_accessed=int(bytes_accessed))

    out = pl.pallas_call(
        _fused_kernel,
        out_shape=jax.ShapeDtypeStruct((C_out, P), out_dtype),
        in_specs=[
            pl.BlockSpec((C_in, P), lambda: (0, 0)),
            pl.BlockSpec((C_in, P), lambda: (0, 0)),
            pl.BlockSpec((C_in, 2), lambda: (0, 0)),
            pl.BlockSpec((C_out, C_in), lambda: (0, 0)),
            pl.BlockSpec((C_out, 2), lambda: (0, 0)),
        ],
        out_specs=pl.BlockSpec((C_out, P), lambda: (0, 0)),
        cost_estimate=cost,
    )(x118, x110, gb1, w, gb2)

    if N == 1:
        return out.reshape(1, C_out, H, W)        # pure reshape
    return jnp.transpose(out.reshape(C_out, N, H, W), (1, 0, 2, 3))


def _reference(x118_nchw, x110_nchw, gamma1, beta1, w_oi, gamma2, beta2):
    """Pure-JAX f32 reference mirroring the PyTorch forward (training-mode BN)."""
    def bn(x, g, b):
        mean = jnp.mean(x, axis=(0, 2, 3), keepdims=True)
        var = jnp.mean((x - mean) ** 2, axis=(0, 2, 3), keepdims=True)
        return (x - mean) * jax.lax.rsqrt(var + EPS) * g.reshape(1, -1, 1, 1) \
            + b.reshape(1, -1, 1, 1)

    x119 = bn(x118_nchw, gamma1, beta1)
    x120 = x119 + x110_nchw
    x121 = jax.lax.conv_general_dilated(
        x120, w_oi, window_strides=(1, 1), padding="VALID",
        dimension_numbers=("NCHW", "OIHW", "NCHW"))
    return bn(x121, gamma2, beta2)


if __name__ == "__main__":
    key = jax.random.PRNGKey(0)
    k1, k2, k3, k4, k5, k6, k7 = jax.random.split(key, 7)

    N, C_in, H, W = 1, 64, 14, 14
    C_out = 384

    x118 = jax.random.normal(k1, (N, C_in, H, W), dtype=jnp.float32)
    x110 = jax.random.normal(k2, (N, C_in, H, W), dtype=jnp.float32)

    gamma1 = 1.0 + 0.1 * jax.random.normal(k3, (C_in,), dtype=jnp.float32)
    beta1 = 0.1 * jax.random.normal(k4, (C_in,), dtype=jnp.float32)
    w_oi = jax.random.normal(k5, (C_out, C_in, 1, 1), dtype=jnp.float32) * 0.05
    gamma2 = 1.0 + 0.1 * jax.random.normal(k6, (C_out,), dtype=jnp.float32)
    beta2 = 0.1 * jax.random.normal(k7, (C_out,), dtype=jnp.float32)

    ref = _reference(x118, x110, gamma1, beta1, w_oi, gamma2, beta2)

    # Default path: f32 output, matching the PyTorch module dtype.
    out = fused_bn_add_conv_bn(x118, x110, gamma1, beta1, w_oi, gamma2, beta2)
    out = jax.block_until_ready(out)
    assert out.shape == (N, C_out, H, W)
    # Tolerance relaxed vs a pure-f32 reference because the 1x1-conv matmul is
    # intentionally run in bf16 on the MXU (BN2 renormalizes right after).
    assert jnp.allclose(out, ref, atol=2e-2, rtol=2e-2), "f32-out mismatch vs reference"

    # bf16-output path (perf-review option: halves the dominant output store).
    out_bf16 = fused_bn_add_conv_bn(x118, x110, gamma1, beta1, w_oi, gamma2,
                                    beta2, out_dtype=jnp.bfloat16)
    out_bf16 = jax.block_until_ready(out_bf16)
    assert out_bf16.dtype == jnp.bfloat16
    assert jnp.allclose(out_bf16.astype(jnp.float32), ref, atol=4e-2, rtol=4e-2), \
        "bf16-out mismatch vs reference"

    print("KERNEL_OK")
</pallas_src>

<mosaic_0001>
module attributes {stable_mosaic.version = 11 : i64} {
  func.func @_fused_kernel(%arg0: memref<64x196xf32, #tpu.memory_space<vmem>>, %arg1: memref<64x196xf32, #tpu.memory_space<vmem>>, %arg2: memref<64x2xf32, #tpu.memory_space<vmem>>, %arg3: memref<384x64xbf16, #tpu.memory_space<vmem>>, %arg4: memref<384x2xf32, #tpu.memory_space<vmem>>, %arg5: memref<384x196xf32, #tpu.memory_space<vmem>>) attributes {dimension_semantics = [], scalar_prefetch = 0 : i64, scratch_operands = 0 : i64, tpu.core_type = #tpu.core_type<tc>} {
    %c0 = arith.constant 0 : index
    %c0_0 = arith.constant 0 : index
    %0 = vector.load %arg0[%c0, %c0_0] : memref<64x196xf32, #tpu.memory_space<vmem>>, vector<64x196xf32>
    %c0_1 = arith.constant 0 : index
    %c0_2 = arith.constant 0 : index
    %1 = vector.load %arg1[%c0_1, %c0_2] : memref<64x196xf32, #tpu.memory_space<vmem>>, vector<64x196xf32>
    %c0_3 = arith.constant 0 : index
    %c0_4 = arith.constant 0 : index
    %2 = vector.load %arg2[%c0_3, %c0_4] : memref<64x2xf32, #tpu.memory_space<vmem>>, vector<64x1xf32>
    %c0_5 = arith.constant 0 : index
    %c1 = arith.constant 1 : index
    %3 = vector.load %arg2[%c0_5, %c1] : memref<64x2xf32, #tpu.memory_space<vmem>>, vector<64x1xf32>
    %cst = arith.constant dense<0.000000e+00> : vector<64xf32>
    %4 = vector.multi_reduction <add>, %0, %cst [1] : vector<64x196xf32> to vector<64xf32>
    %5 = vector.shape_cast %4 : vector<64xf32> to vector<64x1xf32>
    %cst_6 = arith.constant 0.00510204071 : f32
    %6 = vector.broadcast %cst_6 : f32 to vector<64x1xf32>
    %7 = arith.mulf %5, %6 : vector<64x1xf32>
    %8 = vector.broadcast %7 : vector<64x1xf32> to vector<64x196xf32>
    %9 = arith.subf %0, %8 : vector<64x196xf32>
    %10 = arith.mulf %9, %9 : vector<64x196xf32>
    %cst_7 = arith.constant dense<0.000000e+00> : vector<64xf32>
    %11 = vector.multi_reduction <add>, %10, %cst_7 [1] : vector<64x196xf32> to vector<64xf32>
    %12 = vector.shape_cast %11 : vector<64xf32> to vector<64x1xf32>
    %cst_8 = arith.constant 0.00510204071 : f32
    %13 = vector.broadcast %cst_8 : f32 to vector<64x1xf32>
    %14 = arith.mulf %12, %13 : vector<64x1xf32>
    %cst_9 = arith.constant 1.000000e-03 : f32
    %15 = vector.broadcast %cst_9 : f32 to vector<64x1xf32>
    %16 = arith.addf %14, %15 : vector<64x1xf32>
    %17 = math.rsqrt %16 : vector<64x1xf32>
    %18 = arith.mulf %2, %17 : vector<64x1xf32>
    %19 = arith.mulf %7, %18 : vector<64x1xf32>
    %20 = arith.subf %3, %19 : vector<64x1xf32>
    %21 = vector.broadcast %18 : vector<64x1xf32> to vector<64x196xf32>
    %22 = arith.mulf %0, %21 : vector<64x196xf32>
    %23 = vector.broadcast %20 : vector<64x1xf32> to vector<64x196xf32>
    %24 = arith.addf %22, %23 : vector<64x196xf32>
    %25 = arith.addf %24, %1 : vector<64x196xf32>
    %c0_10 = arith.constant 0 : index
    %c0_11 = arith.constant 0 : index
    %26 = vector.load %arg3[%c0_10, %c0_11] : memref<384x64xbf16, #tpu.memory_space<vmem>>, vector<384x64xbf16>
    %27 = arith.truncf %25 : vector<64x196xf32> to vector<64x196xbf16>
    %cst_12 = arith.constant dense<0.000000e+00> : vector<384x196xf32>
    %28 = tpu.matmul %26, %27, %cst_12 {dimension_numbers = #tpu.dot_dimension_numbers<[1], [0], [0], [1], [0, 0, 1, 1], [], []>} : vector<384x64xbf16>, vector<64x196xbf16>, vector<384x196xf32> -> vector<384x196xf32>
    %c0_13 = arith.constant 0 : index
    %c0_14 = arith.constant 0 : index
    %29 = vector.load %arg4[%c0_13, %c0_14] : memref<384x2xf32, #tpu.memory_space<vmem>>, vector<384x1xf32>
    %c0_15 = arith.constant 0 : index
    %c1_16 = arith.constant 1 : index
    %30 = vector.load %arg4[%c0_15, %c1_16] : memref<384x2xf32, #tpu.memory_space<vmem>>, vector<384x1xf32>
    %cst_17 = arith.constant dense<0.000000e+00> : vector<384xf32>
    %31 = vector.multi_reduction <add>, %28, %cst_17 [1] : vector<384x196xf32> to vector<384xf32>
    %32 = vector.shape_cast %31 : vector<384xf32> to vector<384x1xf32>
    %cst_18 = arith.constant 0.00510204071 : f32
    %33 = vector.broadcast %cst_18 : f32 to vector<384x1xf32>
    %34 = arith.mulf %32, %33 : vector<384x1xf32>
    %35 = vector.broadcast %34 : vector<384x1xf32> to vector<384x196xf32>
    %36 = arith.subf %28, %35 : vector<384x196xf32>
    %37 = arith.mulf %36, %36 : vector<384x196xf32>
    %cst_19 = arith.constant dense<0.000000e+00> : vector<384xf32>
    %38 = vector.multi_reduction <add>, %37, %cst_19 [1] : vector<384x196xf32> to vector<384xf32>
    %39 = vector.shape_cast %38 : vector<384xf32> to vector<384x1xf32>
    %cst_20 = arith.constant 0.00510204071 : f32
    %40 = vector.broadcast %cst_20 : f32 to vector<384x1xf32>
    %41 = arith.mulf %39, %40 : vector<384x1xf32>
    %cst_21 = arith.constant 1.000000e-03 : f32
    %42 = vector.broadcast %cst_21 : f32 to vector<384x1xf32>
    %43 = arith.addf %41, %42 : vector<384x1xf32>
    %44 = math.rsqrt %43 : vector<384x1xf32>
    %45 = arith.mulf %29, %44 : vector<384x1xf32>
    %46 = arith.mulf %34, %45 : vector<384x1xf32>
    %47 = arith.subf %30, %46 : vector<384x1xf32>
    %48 = vector.broadcast %45 : vector<384x1xf32> to vector<384x196xf32>
    %49 = arith.mulf %28, %48 : vector<384x196xf32>
    %50 = vector.broadcast %47 : vector<384x1xf32> to vector<384x196xf32>
    %51 = arith.addf %49, %50 : vector<384x196xf32>
    %c0_22 = arith.constant 0 : index
    %c0_23 = arith.constant 0 : index
    %52 = vector.load %arg5[%c0_22, %c0_23] : memref<384x196xf32, #tpu.memory_space<vmem>>, vector<384x196xf32>
    tpu.vector_store %arg5[%c0_22, %c0_23], %51 {strides = array<i32>} : memref<384x196xf32, #tpu.memory_space<vmem>>, vector<384x196xf32>,
    return
  }
}

</mosaic_0001>

<llo_original>
// kernel: tpu_custom_call.1
$region0: #{tpu_custom_call.1}
  #allocation0 [shape = 'u32[]', space=smem, size = 0x4, offset = 0x4, fixed_abs, tag = 'smem constant byte address 0x4 - core index']
  #allocation1 [shape = 'u32[144,128]{1,0:T(1,128)}', space=vmem, size = 0x12000, scoped, tag = 'internal scratch']
  %s0 = inlined_call_operand.vmem [shape: f32[64,196], index: 0, kind: input, shape index: {}]
  %s1 = inlined_call_operand.vmem [shape: f32[64,196], index: 1, kind: input, shape index: {}]
  %s2 = inlined_call_operand.vmem [shape: f32[64,2], index: 2, kind: input, shape index: {}]
  %s3 = inlined_call_operand.vmem [shape: bf16[384,64], index: 3, kind: input, shape index: {}]
  %s4 = inlined_call_operand.vmem [shape: f32[384,2], index: 4, kind: input, shape index: {}]
  %s5 = inlined_call_operand.vmem [shape: f32[384,196], index: 5, kind: output, shape index: {}]
  %s6 = sld [smem:[#allocation0]]
  $region30: #{tpu_custom_call.1} parent=0
    _
  %s8 = ssub.s32 1, %s6
  %s9 = scalar_select 0, %s8, %s6
  // Predicated region
  $region2: #{tpu_custom_call.1} parent=0 // pred_check
    _
  $region3: #{tpu_custom_call.1} parent=0 // pred_check_branch
    %11 = sbr.rel (0) target = $region5
  $region4: #{tpu_custom_call.1} parent=0 // pred_region
    _
  $region5: #{tpu_custom_call.1} parent=0 // pred_fallthru
    _
  // Predicated region
  $region6: #{tpu_custom_call.1} parent=0 // pred_check
    _
  $region7: #{tpu_custom_call.1} parent=0 // pred_check_branch
    %13 = sbr.rel (0) target = $region9
  $region8: #{tpu_custom_call.1} parent=0 // pred_region
    _
  $region9: #{tpu_custom_call.1} parent=0 // pred_fallthru
    _
  // Predicated region
  $region10: #{tpu_custom_call.1} parent=0 // pred_check
    _
  $region11: #{tpu_custom_call.1} parent=0 // pred_check_branch
    %15 = sbr.rel (0) target = $region13
  $region12: #{tpu_custom_call.1} parent=0 // pred_region
    _
  $region13: #{tpu_custom_call.1} parent=0 // pred_fallthru
    _
  // Predicated region
  $region14: #{tpu_custom_call.1} parent=0 // pred_check
    _
  $region15: #{tpu_custom_call.1} parent=0 // pred_check_branch
    %17 = sbr.rel (0) target = $region17
  $region16: #{tpu_custom_call.1} parent=0 // pred_region
    _
  $region17: #{tpu_custom_call.1} parent=0 // pred_fallthru
    _
  // Predicated region
  $region18: #{tpu_custom_call.1} parent=0 // pred_check
    _
  $region19: #{tpu_custom_call.1} parent=0 // pred_check_branch
    %19 = sbr.rel (0) target = $region21
  $region20: #{tpu_custom_call.1} parent=0 // pred_region
    _
  $region21: #{tpu_custom_call.1} parent=0 // pred_fallthru
    _
  %v21 = vld [vmem:[%s0] sm:$0xff]
  %v22 = vld [vmem:[%s0 + $0x8] sm:$0xff]
  %v23 = vld [vmem:[%s0 + $0x10] sm:$0xff]
  %v24 = vld [vmem:[%s0 + $0x18] sm:$0xff]
  %v25 = vld [vmem:[%s0 + $0x20] sm:$0xff]
  %v26 = vld [vmem:[%s0 + $0x28] sm:$0xff]
  %v27 = vld [vmem:[%s0 + $0x30] sm:$0xff]
  %v28 = vld [vmem:[%s0 + $0x38] sm:$0xff]
  %v29 = vld [vmem:[%s0 + $0x40] sm:$0xff]
  %v30 = vld [vmem:[%s0 + $0x48] sm:$0xff]
  %v31 = vld [vmem:[%s0 + $0x50] sm:$0xff]
  %v32 = vld [vmem:[%s0 + $0x58] sm:$0xff]
  %v33 = vld [vmem:[%s0 + $0x60] sm:$0xff]
  %v34 = vld [vmem:[%s0 + $0x68] sm:$0xff]
  %v35 = vld [vmem:[%s0 + $0x70] sm:$0xff]
  %v36 = vld [vmem:[%s0 + $0x78] sm:$0xff]
  %v37 = vld [vmem:[%s1] sm:$0xff]
  %v38 = vld [vmem:[%s1 + $0x8] sm:$0xff]
  %v39 = vld [vmem:[%s1 + $0x10] sm:$0xff]
  %v40 = vld [vmem:[%s1 + $0x18] sm:$0xff]
  %v41 = vld [vmem:[%s1 + $0x20] sm:$0xff]
  %v42 = vld [vmem:[%s1 + $0x28] sm:$0xff]
  %v43 = vld [vmem:[%s1 + $0x30] sm:$0xff]
  %v44 = vld [vmem:[%s1 + $0x38] sm:$0xff]
  %v45 = vld [vmem:[%s1 + $0x40] sm:$0xff]
  %v46 = vld [vmem:[%s1 + $0x48] sm:$0xff]
  %v47 = vld [vmem:[%s1 + $0x50] sm:$0xff]
  %v48 = vld [vmem:[%s1 + $0x58] sm:$0xff]
  %v49 = vld [vmem:[%s1 + $0x60] sm:$0xff]
  %v50 = vld [vmem:[%s1 + $0x68] sm:$0xff]
  %v51 = vld [vmem:[%s1 + $0x70] sm:$0xff]
  %v52 = vld [vmem:[%s1 + $0x78] sm:$0xff]
  %v53 = vld [vmem:[%s2] sm:$0xff]
  %v54 = vld [vmem:[%s2 + $0x8] sm:$0xff]
  %v55 = vld [vmem:[%s2 + $0x10] sm:$0xff]
  %v56 = vld [vmem:[%s2 + $0x18] sm:$0xff]
  %v57 = vld [vmem:[%s2 + $0x20] sm:$0xff]
  %v58 = vld [vmem:[%s2 + $0x28] sm:$0xff]
  %v59 = vld [vmem:[%s2 + $0x30] sm:$0xff]
  %v60 = vld [vmem:[%s2 + $0x38] sm:$0xff]
  %vm61 = vcmask 556032
  %v62 = vsel %vm61, %v22, 0.0
  %v63 = vadd.f32 %v21, %v62
  %64 = vadd.xlane.f32.xlu0 %v63
  %v65 = vpop.xlane.xlu0 %64
  %v66 = vsel %vm61, %v24, 0.0
  %v67 = vadd.f32 %v23, %v66
  %68 = vadd.xlane.f32.xlu0 %v67
  %v69 = vpop.xlane.xlu0 %68
  %v70 = vsel %vm61, %v26, 0.0
  %v71 = vadd.f32 %v25, %v70
  %72 = vadd.xlane.f32.xlu0 %v71
  %v73 = vpop.xlane.xlu0 %72
  %v74 = vsel %vm61, %v28, 0.0
  %v75 = vadd.f32 %v27, %v74
  %76 = vadd.xlane.f32.xlu0 %v75
  %v77 = vpop.xlane.xlu0 %76
  %v78 = vsel %vm61, %v30, 0.0
  %v79 = vadd.f32 %v29, %v78
  %80 = vadd.xlane.f32.xlu0 %v79
  %v81 = vpop.xlane.xlu0 %80
  %v82 = vsel %vm61, %v32, 0.0
  %v83 = vadd.f32 %v31, %v82
  %84 = vadd.xlane.f32.xlu0 %v83
  %v85 = vpop.xlane.xlu0 %84
  %v86 = vsel %vm61, %v34, 0.0
  %v87 = vadd.f32 %v33, %v86
  %88 = vadd.xlane.f32.xlu0 %v87
  %v89 = vpop.xlane.xlu0 %88
  %v90 = vsel %vm61, %v36, 0.0
  %v91 = vadd.f32 %v35, %v90
  %92 = vadd.xlane.f32.xlu0 %v91
  %v93 = vpop.xlane.xlu0 %92
  %v94 = vmul.f32 %v65, 0.0051020407
  %v95 = vmul.f32 %v69, 0.0051020407
  %v96 = vmul.f32 %v73, 0.0051020407
  %v97 = vmul.f32 %v77, 0.0051020407
  %v98 = vmul.f32 %v81, 0.0051020407
  %v99 = vmul.f32 %v85, 0.0051020407
  %v100 = vmul.f32 %v89, 0.0051020407
  %v101 = vmul.f32 %v93, 0.0051020407
  %v102 = vsub.f32 %v21, %v94
  %v103 = vsub.f32 %v22, %v94
  %v104 = vsub.f32 %v23, %v95
  %v105 = vsub.f32 %v24, %v95
  %v106 = vsub.f32 %v25, %v96
  %v107 = vsub.f32 %v26, %v96
  %v108 = vsub.f32 %v27, %v97
  %v109 = vsub.f32 %v28, %v97
  %v110 = vsub.f32 %v29, %v98
  %v111 = vsub.f32 %v30, %v98
  %v112 = vsub.f32 %v31, %v99
  %v113 = vsub.f32 %v32, %v99
  %v114 = vsub.f32 %v33, %v100
  %v115 = vsub.f32 %v34, %v100
  %v116 = vsub.f32 %v35, %v101
  %v117 = vsub.f32 %v36, %v101
  %v118 = vmul.f32 %v102, %v102
  %v119 = vmul.f32 %v103, %v103
  %v120 = vmul.f32 %v104, %v104
  %v121 = vmul.f32 %v105, %v105
  %v122 = vmul.f32 %v106, %v106
  %v123 = vmul.f32 %v107, %v107
  %v124 = vmul.f32 %v108, %v108
  %v125 = vmul.f32 %v109, %v109
  %v126 = vmul.f32 %v110, %v110
  %v127 = vmul.f32 %v111, %v111
  %v128 = vmul.f32 %v112, %v112
  %v129 = vmul.f32 %v113, %v113
  %v130 = vmul.f32 %v114, %v114
  %v131 = vmul.f32 %v115, %v115
  %v132 = vmul.f32 %v116, %v116
  %v133 = vmul.f32 %v117, %v117
  %v134 = vsel %vm61, %v119, 0.0
  %v135 = vadd.f32 %v118, %v134
  %136 = vadd.xlane.f32.xlu0 %v135
  %v137 = vpop.xlane.xlu0 %136
  %v138 = vsel %vm61, %v121, 0.0
  %v139 = vadd.f32 %v120, %v138
  %140 = vadd.xlane.f32.xlu0 %v139
  %v141 = vpop.xlane.xlu0 %140
  %v142 = vsel %vm61, %v123, 0.0
  %v143 = vadd.f32 %v122, %v142
  %144 = vadd.xlane.f32.xlu0 %v143
  %v145 = vpop.xlane.xlu0 %144
  %v146 = vsel %vm61, %v125, 0.0
  %v147 = vadd.f32 %v124, %v146
  %148 = vadd.xlane.f32.xlu0 %v147
  %v149 = vpop.xlane.xlu0 %148
  %v150 = vsel %vm61, %v127, 0.0
  %v151 = vadd.f32 %v126, %v150
  %152 = vadd.xlane.f32.xlu0 %v151
  %v153 = vpop.xlane.xlu0 %152
  %v154 = vsel %vm61, %v129, 0.0
  %v155 = vadd.f32 %v128, %v154
  %156 = vadd.xlane.f32.xlu0 %v155
  %v157 = vpop.xlane.xlu0 %156
  %v158 = vsel %vm61, %v131, 0.0
  %v159 = vadd.f32 %v130, %v158
  %160 = vadd.xlane.f32.xlu0 %v159
  %v161 = vpop.xlane.xlu0 %160
  %v162 = vsel %vm61, %v133, 0.0
  %v163 = vadd.f32 %v132, %v162
  %164 = vadd.xlane.f32.xlu0 %v163
  %v165 = vpop.xlane.xlu0 %164
  %v166 = vmul.f32 %v137, 0.0051020407
  %v167 = vmul.f32 %v141, 0.0051020407
  %v168 = vmul.f32 %v145, 0.0051020407
  %v169 = vmul.f32 %v149, 0.0051020407
  %v170 = vmul.f32 %v153, 0.0051020407
  %v171 = vmul.f32 %v157, 0.0051020407
  %v172 = vmul.f32 %v161, 0.0051020407
  %v173 = vmul.f32 %v165, 0.0051020407
  %v174 = vadd.f32 %v166, 0.001
  %v175 = vadd.f32 %v167, 0.001
  %v176 = vadd.f32 %v168, 0.001
  %v177 = vadd.f32 %v169, 0.001
  %v178 = vadd.f32 %v170, 0.001
  %v179 = vadd.f32 %v171, 0.001
  %v180 = vadd.f32 %v172, 0.001
  %v181 = vadd.f32 %v173, 0.001
  %v182 = vrsqrt.pop %v174
  %v183 = vrsqrt.pop %v175
  %v184 = vrsqrt.pop %v176
  %v185 = vrsqrt.pop %v177
  %v186 = vrsqrt.pop %v178
  %v187 = vrsqrt.pop %v179
  %v188 = vrsqrt.pop %v180
  %v189 = vrsqrt.pop %v181
  %v190 = vmul.f32 %v53, %v182
  %v191 = vmul.f32 %v54, %v183
  %v192 = vmul.f32 %v55, %v184
  %v193 = vmul.f32 %v56, %v185
  %v194 = vmul.f32 %v57, %v186
  %v195 = vmul.f32 %v58, %v187
  %v196 = vmul.f32 %v59, %v188
  %v197 = vmul.f32 %v60, %v189
  %v198 = vmul.f32 %v94, %v190
  %v199 = vmul.f32 %v95, %v191
  %v200 = vmul.f32 %v96, %v192
  %v201 = vmul.f32 %v97, %v193
  %v202 = vmul.f32 %v98, %v194
  %v203 = vmul.f32 %v99, %v195
  %v204 = vmul.f32 %v100, %v196
  %v205 = vmul.f32 %v101, %v197
  %214 = vrot.lane.b32.xlu0 %v198, 1
  %v215 = vpop.permute.xlu0 %214
  %216 = vrot.lane.b32.xlu0 %v199, 1
  %v217 = vpop.permute.xlu0 %216
  %218 = vrot.lane.b32.xlu0 %v200, 1
  %v219 = vpop.permute.xlu0 %218
  %220 = vrot.lane.b32.xlu0 %v201, 1
  %v221 = vpop.permute.xlu0 %220
  %222 = vrot.lane.b32.xlu0 %v202, 1
  %v223 = vpop.permute.xlu0 %222
  %224 = vrot.lane.b32.xlu0 %v203, 1
  %v225 = vpop.permute.xlu0 %224
  %226 = vrot.lane.b32.xlu0 %v204, 1
  %v227 = vpop.permute.xlu0 %226
  %228 = vrot.lane.b32.xlu0 %v205, 1
  %v229 = vpop.permute.xlu0 %228
  %v238 = vsub.f32 %v53, %v215
  %v239 = vsub.f32 %v54, %v217
  %v240 = vsub.f32 %v55, %v219
  %v241 = vsub.f32 %v56, %v221
  %v242 = vsub.f32 %v57, %v223
  %v243 = vsub.f32 %v58, %v225
  %v244 = vsub.f32 %v59, %v227
  %v245 = vsub.f32 %v60, %v229
  %247 = vset.pattern.permute.xlu0 0
  %248 = vperm.xlu0 %247, %v190
  %v249 = vpop.permute.xlu0 %248
  %252 = vset.pattern.permute.xlu0 0
  %253 = vperm.xlu0 %252, %v191
  %v254 = vpop.permute.xlu0 %253
  %257 = vset.pattern.permute.xlu0 0
  %258 = vperm.xlu0 %257, %v192
  %v259 = vpop.permute.xlu0 %258
  %262 = vset.pattern.permute.xlu0 0
  %263 = vperm.xlu0 %262, %v193
  %v264 = vpop.permute.xlu0 %263
  %267 = vset.pattern.permute.xlu0 0
  %268 = vperm.xlu0 %267, %v194
  %v269 = vpop.permute.xlu0 %268
  %272 = vset.pattern.permute.xlu0 0
  %273 = vperm.xlu0 %272, %v195
  %v274 = vpop.permute.xlu0 %273
  %277 = vset.pattern.permute.xlu0 0
  %278 = vperm.xlu0 %277, %v196
  %v279 = vpop.permute.xlu0 %278
  %282 = vset.pattern.permute.xlu0 0
  %283 = vperm.xlu0 %282, %v197
  %v284 = vpop.permute.xlu0 %283
  %v286 = vmul.f32 %v21, %v249
  %v287 = vmul.f32 %v22, %v249
  %v288 = vmul.f32 %v23, %v254
  %v289 = vmul.f32 %v24, %v254
  %v290 = vmul.f32 %v25, %v259
  %v291 = vmul.f32 %v26, %v259
  %v292 = vmul.f32 %v27, %v264
  %v293 = vmul.f32 %v28, %v264
  %v294 = vmul.f32 %v29, %v269
  %v295 = vmul.f32 %v30, %v269
  %v296 = vmul.f32 %v31, %v274
  %v297 = vmul.f32 %v32, %v274
  %v298 = vmul.f32 %v33, %v279
  %v299 = vmul.f32 %v34, %v279
  %v300 = vmul.f32 %v35, %v284
  %v301 = vmul.f32 %v36, %v284
  %303 = vset.pattern.permute.xlu0 1
  %304 = vperm.xlu0 %303, %v238
  %v305 = vpop.permute.xlu0 %304
  %308 = vset.pattern.permute.xlu0 1
  %309 = vperm.xlu0 %308, %v239
  %v310 = vpop.permute.xlu0 %309
  %313 = vset.pattern.permute.xlu0 1
  %314 = vperm.xlu0 %313, %v240
  %v315 = vpop.permute.xlu0 %314
  %318 = vset.pattern.permute.xlu0 1
  %319 = vperm.xlu0 %318, %v241
  %v320 = vpop.permute.xlu0 %319
  %323 = vset.pattern.permute.xlu0 1
  %324 = vperm.xlu0 %323, %v242
  %v325 = vpop.permute.xlu0 %324
  %328 = vset.pattern.permute.xlu0 1
  %329 = vperm.xlu0 %328, %v243
  %v330 = vpop.permute.xlu0 %329
  %333 = vset.pattern.permute.xlu0 1
  %334 = vperm.xlu0 %333, %v244
  %v335 = vpop.permute.xlu0 %334
  %338 = vset.pattern.permute.xlu0 1
  %339 = vperm.xlu0 %338, %v245
  %v340 = vpop.permute.xlu0 %339
  %v342 = vadd.f32 %v286, %v305
  %v343 = vadd.f32 %v287, %v305
  %v344 = vadd.f32 %v288, %v310
  %v345 = vadd.f32 %v289, %v310
  %v346 = vadd.f32 %v290, %v315
  %v347 = vadd.f32 %v291, %v315
  %v348 = vadd.f32 %v292, %v320
  %v349 = vadd.f32 %v293, %v320
  %v350 = vadd.f32 %v294, %v325
  %v351 = vadd.f32 %v295, %v325
  %v352 = vadd.f32 %v296, %v330
  %v353 = vadd.f32 %v297, %v330
  %v354 = vadd.f32 %v298, %v335
  %v355 = vadd.f32 %v299, %v335
  %v356 = vadd.f32 %v300, %v340
  %v357 = vadd.f32 %v301, %v340
  %v358 = vadd.f32 %v342, %v37
  %v359 = vadd.f32 %v343, %v38
  %v360 = vadd.f32 %v344, %v39
  %v361 = vadd.f32 %v345, %v40
  %v362 = vadd.f32 %v346, %v41
  %v363 = vadd.f32 %v347, %v42
  %v364 = vadd.f32 %v348, %v43
  %v365 = vadd.f32 %v349, %v44
  %v366 = vadd.f32 %v350, %v45
  %v367 = vadd.f32 %v351, %v46
  %v368 = vadd.f32 %v352, %v47
  %v369 = vadd.f32 %v353, %v48
  %v370 = vadd.f32 %v354, %v49
  %v371 = vadd.f32 %v355, %v50
  %v372 = vadd.f32 %v356, %v51
  %v373 = vadd.f32 %v357, %v52
  %v374 = vld [vmem:[%s3] sm:$0xf]
  %v375 = vld [vmem:[%s3 + $0x4] sm:$0xf]
  %v376 = vld [vmem:[%s3 + $0x8] sm:$0xf]
  %v377 = vld [vmem:[%s3 + $0xc] sm:$0xf]
  %v378 = vld [vmem:[%s3 + $0x10] sm:$0xf]
  %v379 = vld [vmem:[%s3 + $0x14] sm:$0xf]
  %v380 = vld [vmem:[%s3 + $0x18] sm:$0xf]
  %v381 = vld [vmem:[%s3 + $0x1c] sm:$0xf]
  %v382 = vld [vmem:[%s3 + $0x20] sm:$0xf]
  %v383 = vld [vmem:[%s3 + $0x24] sm:$0xf]
  %v384 = vld [vmem:[%s3 + $0x28] sm:$0xf]
  %v385 = vld [vmem:[%s3 + $0x2c] sm:$0xf]
  %v386 = vld [vmem:[%s3 + $0x30] sm:$0xf]
  %v387 = vld [vmem:[%s3 + $0x34] sm:$0xf]
  %v388 = vld [vmem:[%s3 + $0x38] sm:$0xf]
  %v389 = vld [vmem:[%s3 + $0x3c] sm:$0xf]
  %v390 = vld [vmem:[%s3 + $0x40] sm:$0xf]
  %v391 = vld [vmem:[%s3 + $0x44] sm:$0xf]
  %v392 = vld [vmem:[%s3 + $0x48] sm:$0xf]
  %v393 = vld [vmem:[%s3 + $0x4c] sm:$0xf]
  %v394 = vld [vmem:[%s3 + $0x50] sm:$0xf]
  %v395 = vld [vmem:[%s3 + $0x54] sm:$0xf]
  %v396 = vld [vmem:[%s3 + $0x58] sm:$0xf]
  %v397 = vld [vmem:[%s3 + $0x5c] sm:$0xf]
  %v398 = vld [vmem:[%s3 + $0x60] sm:$0xf]
  %v399 = vld [vmem:[%s3 + $0x64] sm:$0xf]
  %v400 = vld [vmem:[%s3 + $0x68] sm:$0xf]
  %v401 = vld [vmem:[%s3 + $0x6c] sm:$0xf]
  %v402 = vld [vmem:[%s3 + $0x70] sm:$0xf]
  %v403 = vld [vmem:[%s3 + $0x74] sm:$0xf]
  %v404 = vld [vmem:[%s3 + $0x78] sm:$0xf]
  %v405 = vld [vmem:[%s3 + $0x7c] sm:$0xf]
  %v406 = vld [vmem:[%s3 + $0x80] sm:$0xf]
  %v407 = vld [vmem:[%s3 + $0x84] sm:$0xf]
  %v408 = vld [vmem:[%s3 + $0x88] sm:$0xf]
  %v409 = vld [vmem:[%s3 + $0x8c] sm:$0xf]
  %v410 = vld [vmem:[%s3 + $0x90] sm:$0xf]
  %v411 = vld [vmem:[%s3 + $0x94] sm:$0xf]
  %v412 = vld [vmem:[%s3 + $0x98] sm:$0xf]
  %v413 = vld [vmem:[%s3 + $0x9c] sm:$0xf]
  %v414 = vld [vmem:[%s3 + $0xa0] sm:$0xf]
  %v415 = vld [vmem:[%s3 + $0xa4] sm:$0xf]
  %v416 = vld [vmem:[%s3 + $0xa8] sm:$0xf]
  %v417 = vld [vmem:[%s3 + $0xac] sm:$0xf]
  %v418 = vld [vmem:[%s3 + $0xb0] sm:$0xf]
  %v419 = vld [vmem:[%s3 + $0xb4] sm:$0xf]
  %v420 = vld [vmem:[%s3 + $0xb8] sm:$0xf]
  %v421 = vld [vmem:[%s3 + $0xbc] sm:$0xf]
  %v422 = vpack.c.bf16 %v360, %v358
  %v423 = vpack.c.bf16 %v361, %v359
  %v424 = vpack.c.bf16 %v364, %v362
  %v425 = vpack.c.bf16 %v365, %v363
  %v426 = vpack.c.bf16 %v368, %v366
  %v427 = vpack.c.bf16 %v369, %v367
  %v428 = vpack.c.bf16 %v372, %v370
  %v429 = vpack.c.bf16 %v373, %v371
  %v478 = vunpack.c.l.b16 %v374
  %v479 = vunpack.c.l.b16 %v375
  %v480 = vunpack.c.l.b16 %v376
  %v481 = vunpack.c.l.b16 %v377
  %v482 = vunpack.c.l.b16 %v378
  %v483 = vunpack.c.l.b16 %v379
  %v484 = vunpack.c.l.b16 %v380
  %v485 = vunpack.c.l.b16 %v381
  %v486 = vunpack.c.l.b16 %v382
  %v487 = vunpack.c.l.b16 %v383
  %v488 = vunpack.c.l.b16 %v384
  %v489 = vunpack.c.l.b16 %v385
  %v490 = vunpack.c.l.b16 %v386
  %v491 = vunpack.c.l.b16 %v387
  %v492 = vunpack.c.l.b16 %v388
  %v493 = vunpack.c.l.b16 %v389
  %v494 = vunpack.c.l.b16 %v390
  %v495 = vunpack.c.l.b16 %v391
  %v496 = vunpack.c.l.b16 %v392
  %v497 = vunpack.c.l.b16 %v393
  %v498 = vunpack.c.l.b16 %v394
  %v499 = vunpack.c.l.b16 %v395
  %v500 = vunpack.c.l.b16 %v396
  %v501 = vunpack.c.l.b16 %v397
  %v502 = vunpack.c.l.b16 %v398
  %v503 = vunpack.c.l.b16 %v399
  %v504 = vunpack.c.l.b16 %v400
  %v505 = vunpack.c.l.b16 %v401
  %v506 = vunpack.c.l.b16 %v402
  %v507 = vunpack.c.l.b16 %v403
  %v508 = vunpack.c.l.b16 %v404
  %v509 = vunpack.c.l.b16 %v405
  %v510 = vunpack.c.l.b16 %v406
  %v511 = vunpack.c.l.b16 %v407
  %v512 = vunpack.c.l.b16 %v408
  %v513 = vunpack.c.l.b16 %v409
  %v514 = vunpack.c.l.b16 %v410
  %v515 = vunpack.c.l.b16 %v411
  %v516 = vunpack.c.l.b16 %v412
  %v517 = vunpack.c.l.b16 %v413
  %v518 = vunpack.c.l.b16 %v414
  %v519 = vunpack.c.l.b16 %v415
  %v520 = vunpack.c.l.b16 %v416
  %v521 = vunpack.c.l.b16 %v417
  %v522 = vunpack.c.l.b16 %v418
  %v523 = vunpack.c.l.b16 %v419
  %v524 = vunpack.c.l.b16 %v420
  %v525 = vunpack.c.l.b16 %v421
  %v526 = vpack.c.b16 %v479, %v478
  %v527 = vpack.c.b16 %v481, %v480
  %v528 = vpack.c.b16 %v483, %v482
  %v529 = vpack.c.b16 %v485, %v484
  %v530 = vpack.c.b16 %v487, %v486
  %v531 = vpack.c.b16 %v489, %v488
  %v532 = vpack.c.b16 %v491, %v490
  %v533 = vpack.c.b16 %v493, %v492
  %v534 = vpack.c.b16 %v495, %v494
  %v535 = vpack.c.b16 %v497, %v496
  %v536 = vpack.c.b16 %v499, %v498
  %v537 = vpack.c.b16 %v501, %v500
  %v538 = vpack.c.b16 %v503, %v502
  %v539 = vpack.c.b16 %v505, %v504
  %v540 = vpack.c.b16 %v507, %v506
  %v541 = vpack.c.b16 %v509, %v508
  %v542 = vpack.c.b16 %v511, %v510
  %v543 = vpack.c.b16 %v513, %v512
  %v544 = vpack.c.b16 %v515, %v514
  %v545 = vpack.c.b16 %v517, %v516
  %v546 = vpack.c.b16 %v519, %v518
  %v547 = vpack.c.b16 %v521, %v520
  %v548 = vpack.c.b16 %v523, %v522
  %v549 = vpack.c.b16 %v525, %v524
  %vm550 = vcmask 523264
  %v552 = vsel %vm550, %v526, 0
  %v555 = vsel %vm550, %v527, 0
  %v558 = vsel %vm550, %v528, 0
  %v561 = vsel %vm550, %v529, 0
  %v564 = vsel %vm550, %v530, 0
  %v567 = vsel %vm550, %v531, 0
  %v570 = vsel %vm550, %v532, 0
  %v573 = vsel %vm550, %v533, 0
  %v576 = vsel %vm550, %v534, 0
  %v579 = vsel %vm550, %v535, 0
  %v582 = vsel %vm550, %v536, 0
  %v585 = vsel %vm550, %v537, 0
  %v588 = vsel %vm550, %v538, 0
  %v591 = vsel %vm550, %v539, 0
  %v594 = vsel %vm550, %v540, 0
  %v597 = vsel %vm550, %v541, 0
  %v600 = vsel %vm550, %v542, 0
  %v603 = vsel %vm550, %v543, 0
  %v606 = vsel %vm550, %v544, 0
  %v609 = vsel %vm550, %v545, 0
  %v612 = vsel %vm550, %v546, 0
  %v615 = vsel %vm550, %v547, 0
  %v618 = vsel %vm550, %v548, 0
  %v621 = vsel %vm550, %v549, 0
  %623 = vmatprep.subr.bf16.mxu0 %v423
  %624 = vmatpush1.bf16.msra.mxu0 %v422
  %625 = vmatprep.subr.bf16.mxu0 %v425
  %626 = vmatpush1.bf16.msra.mxu0 %v424
  %627 = vmatprep.subr.bf16.mxu0 %v427
  %628 = vmatpush1.bf16.msra.mxu0 %v426
  %629 = vmatprep.subr.bf16.mxu0 %v429
  %630 = vmatpush1.bf16.msra.mxu0 %v428
  %631 = vmatprep.subr.bf16.mxu0 0
  %632 = vmatpush1.bf16.msra.mxu0 0
  %633 = vmatprep.subr.bf16.mxu0 0
  %634 = vmatpush1.bf16.msra.mxu0 0
  %635 = vmatprep.subr.bf16.mxu0 0
  %636 = vmatpush1.bf16.msra.mxu0 0
  %637 = vmatprep.subr.bf16.mxu0 0
  %638 = vmatpush1.bf16.msra.mxu0 0
  %639 = vmatprep.subr.bf16.mxu0 0
  %640 = vmatpush1.bf16.msra.mxu0 0
  %641 = vmatprep.subr.bf16.mxu0 0
  %642 = vmatpush1.bf16.msra.mxu0 0
  %643 = vmatprep.subr.bf16.mxu0 0
  %644 = vmatpush1.bf16.msra.mxu0 0
  %645 = vmatprep.subr.bf16.mxu0 0
  %646 = vmatpush1.bf16.msra.mxu0 0
  %647 = vmatprep.subr.bf16.mxu0 0
  %648 = vmatpush1.bf16.msra.mxu0 0
  %649 = vmatprep.subr.bf16.mxu0 0
  %650 = vmatpush1.bf16.msra.mxu0 0
  %651 = vmatprep.subr.bf16.mxu0 0
  %652 = vmatpush1.bf16.msra.mxu0 0
  %653 = vmatprep.subr.bf16.mxu0 0
  %654 = vmatpush1.bf16.msra.mxu0 0
  %655 = vmatprep.mubr.bf16.mxu0 0
  %656 = vmatmul.mubr.bf16.gmra.mrb[0].mxu0 %v552
  %v657 = vpop.f32.mrb[0].mxu0
  %v658 = vadd.f32 0.0, %v657
  %v659 = vpop.f32.mrb[0].mxu0
  %v660 = vadd.f32 0.0, %v659
  %v661 = vpop.f32.mrb[0].mxu0
  %v662 = vadd.f32 0.0, %v661
  %v663 = vpop.f32.mrb[0].mxu0
  %v664 = vadd.f32 0.0, %v663
  %665 = vmatprep.mubr.bf16.mxu0 0
  %666 = vmatmul.mubr.bf16.gmra.mrb[0].mxu0 %v555
  %v667 = vpop.f32.mrb[0].mxu0
  %v668 = vadd.f32 0.0, %v667
  %v669 = vpop.f32.mrb[0].mxu0
  %v670 = vadd.f32 0.0, %v669
  %v671 = vpop.f32.mrb[0].mxu0
  %v672 = vadd.f32 0.0, %v671
  %v673 = vpop.f32.mrb[0].mxu0
  %v674 = vadd.f32 0.0, %v673
  %675 = vmatprep.mubr.bf16.mxu0 0
  %676 = vmatmul.mubr.bf16.gmra.mrb[0].mxu0 %v558
  %v677 = vpop.f32.mrb[0].mxu0
  %v678 = vadd.f32 0.0, %v677
  %v679 = vpop.f32.mrb[0].mxu0
  %v680 = vadd.f32 0.0, %v679
  %v681 = vpop.f32.mrb[0].mxu0
  %v682 = vadd.f32 0.0, %v681
  %v683 = vpop.f32.mrb[0].mxu0
  %v684 = vadd.f32 0.0, %v683
  %685 = vmatprep.mubr.bf16.mxu0 0
  %686 = vmatmul.mubr.bf16.gmra.mrb[0].mxu0 %v561
  %v687 = vpop.f32.mrb[0].mxu0
  %v688 = vadd.f32 0.0, %v687
  %v689 = vpop.f32.mrb[0].mxu0
  %v690 = vadd.f32 0.0, %v689
  %v691 = vpop.f32.mrb[0].mxu0
  %v692 = vadd.f32 0.0, %v691
  %v693 = vpop.f32.mrb[0].mxu0
  %v694 = vadd.f32 0.0, %v693
  %695 = vmatprep.mubr.bf16.mxu0 0
  %696 = vmatmul.mubr.bf16.gmra.mrb[0].mxu0 %v564
  %v697 = vpop.f32.mrb[0].mxu0
  %v698 = vadd.f32 0.0, %v697
  %v699 = vpop.f32.mrb[0].mxu0
  %v700 = vadd.f32 0.0, %v699
  %v701 = vpop.f32.mrb[0].mxu0
  %v702 = vadd.f32 0.0, %v701
  %v703 = vpop.f32.mrb[0].mxu0
  %v704 = vadd.f32 0.0, %v703
  %705 = vmatprep.mubr.bf16.mxu0 0
  %706 = vmatmul.mubr.bf16.gmra.mrb[0].mxu0 %v567
  %v707 = vpop.f32.mrb[0].mxu0
  %v708 = vadd.f32 0.0, %v707
  %v709 = vpop.f32.mrb[0].mxu0
  %v710 = vadd.f32 0.0, %v709
  %v711 = vpop.f32.mrb[0].mxu0
  %v712 = vadd.f32 0.0, %v711
  %v713 = vpop.f32.mrb[0].mxu0
  %v714 = vadd.f32 0.0, %v713
  %715 = vmatprep.mubr.bf16.mxu0 0
  %716 = vmatmul.mubr.bf16.gmra.mrb[0].mxu0 %v570
  %v717 = vpop.f32.mrb[0].mxu0
  %v718 = vadd.f32 0.0, %v717
  %v719 = vpop.f32.mrb[0].mxu0
  %v720 = vadd.f32 0.0, %v719
  %v721 = vpop.f32.mrb[0].mxu0
  %v722 = vadd.f32 0.0, %v721
  %v723 = vpop.f32.mrb[0].mxu0
  %v724 = vadd.f32 0.0, %v723
  %725 = vmatprep.mubr.bf16.mxu0 0
  %726 = vmatmul.mubr.bf16.gmra.mrb[0].mxu0 %v573
  %v727 = vpop.f32.mrb[0].mxu0
  %v728 = vadd.f32 0.0, %v727
  %v729 = vpop.f32.mrb[0].mxu0
  %v730 = vadd.f32 0.0, %v729
  %v731 = vpop.f32.mrb[0].mxu0
  %v732 = vadd.f32 0.0, %v731
  %v733 = vpop.f32.mrb[0].mxu0
  %v734 = vadd.f32 0.0, %v733
  %735 = vmatprep.mubr.bf16.mxu0 0
  %736 = vmatmul.mubr.bf16.gmra.mrb[0].mxu0 %v576
  %v737 = vpop.f32.mrb[0].mxu0
  %v738 = vadd.f32 0.0, %v737
  %v739 = vpop.f32.mrb[0].mxu0
  %v740 = vadd.f32 0.0, %v739
  %v741 = vpop.f32.mrb[0].mxu0
  %v742 = vadd.f32 0.0, %v741
  %v743 = vpop.f32.mrb[0].mxu0
  %v744 = vadd.f32 0.0, %v743
  %745 = vmatprep.mubr.bf16.mxu0 0
  %746 = vmatmul.mubr.bf16.gmra.mrb[0].mxu0 %v579
  %v747 = vpop.f32.mrb[0].mxu0
  %v748 = vadd.f32 0.0, %v747
  %v749 = vpop.f32.mrb[0].mxu0
  %v750 = vadd.f32 0.0, %v749
  %v751 = vpop.f32.mrb[0].mxu0
  %v752 = vadd.f32 0.0, %v751
  %v753 = vpop.f32.mrb[0].mxu0
  %v754 = vadd.f32 0.0, %v753
  %755 = vmatprep.mubr.bf16.mxu0 0
  %756 = vmatmul.mubr.bf16.gmra.mrb[0].mxu0 %v582
  %v757 = vpop.f32.mrb[0].mxu0
  %v758 = vadd.f32 0.0, %v757
  %v759 = vpop.f32.mrb[0].mxu0
  %v760 = vadd.f32 0.0, %v759
  %v761 = vpop.f32.mrb[0].mxu0
  %v762 = vadd.f32 0.0, %v761
  %v763 = vpop.f32.mrb[0].mxu0
  %v764 = vadd.f32 0.0, %v763
  %765 = vmatprep.mubr.bf16.mxu0 0
  %766 = vmatmul.mubr.bf16.gmra.mrb[0].mxu0 %v585
  %v767 = vpop.f32.mrb[0].mxu0
  %v768 = vadd.f32 0.0, %v767
  %v769 = vpop.f32.mrb[0].mxu0
  %v770 = vadd.f32 0.0, %v769
  %v771 = vpop.f32.mrb[0].mxu0
  %v772 = vadd.f32 0.0, %v771
  %v773 = vpop.f32.mrb[0].mxu0
  %v774 = vadd.f32 0.0, %v773
  %775 = vmatprep.mubr.bf16.mxu0 0
  %776 = vmatmul.mubr.bf16.gmra.mrb[0].mxu0 %v588
  %v777 = vpop.f32.mrb[0].mxu0
  %v778 = vadd.f32 0.0, %v777
  %v779 = vpop.f32.mrb[0].mxu0
  %v780 = vadd.f32 0.0, %v779
  %v781 = vpop.f32.mrb[0].mxu0
  %v782 = vadd.f32 0.0, %v781
  %v783 = vpop.f32.mrb[0].mxu0
  %v784 = vadd.f32 0.0, %v783
  %785 = vmatprep.mubr.bf16.mxu0 0
  %786 = vmatmul.mubr.bf16.gmra.mrb[0].mxu0 %v591
  %v787 = vpop.f32.mrb[0].mxu0
  %v788 = vadd.f32 0.0, %v787
  %v789 = vpop.f32.mrb[0].mxu0
  %v790 = vadd.f32 0.0, %v789
  %v791 = vpop.f32.mrb[0].mxu0
  %v792 = vadd.f32 0.0, %v791
  %v793 = vpop.f32.mrb[0].mxu0
  %v794 = vadd.f32 0.0, %v793
  %795 = vmatprep.mubr.bf16.mxu0 0
  %796 = vmatmul.mubr.bf16.gmra.mrb[0].mxu0 %v594
  %v797 = vpop.f32.mrb[0].mxu0
  %v798 = vadd.f32 0.0, %v797
  %v799 = vpop.f32.mrb[0].mxu0
  %v800 = vadd.f32 0.0, %v799
  %v801 = vpop.f32.mrb[0].mxu0
  %v802 = vadd.f32 0.0, %v801
  %v803 = vpop.f32.mrb[0].mxu0
  %v804 = vadd.f32 0.0, %v803
  %805 = vmatprep.mubr.bf16.mxu0 0
  %806 = vmatmul.mubr.bf16.gmra.mrb[0].mxu0 %v597
  %v807 = vpop.f32.mrb[0].mxu0
  %v808 = vadd.f32 0.0, %v807
  %v809 = vpop.f32.mrb[0].mxu0
  %v810 = vadd.f32 0.0, %v809
  %v811 = vpop.f32.mrb[0].mxu0
  %v812 = vadd.f32 0.0, %v811
  %v813 = vpop.f32.mrb[0].mxu0
  %v814 = vadd.f32 0.0, %v813
  %815 = vmatprep.mubr.bf16.mxu0 0
  %816 = vmatmul.mubr.bf16.gmra.mrb[0].mxu0 %v600
  %v817 = vpop.f32.mrb[0].mxu0
  %v818 = vadd.f32 0.0, %v817
  %v819 = vpop.f32.mrb[0].mxu0
  %v820 = vadd.f32 0.0, %v819
  %v821 = vpop.f32.mrb[0].mxu0
  %v822 = vadd.f32 0.0, %v821
  %v823 = vpop.f32.mrb[0].mxu0
  %v824 = vadd.f32 0.0, %v823
  %825 = vmatprep.mubr.bf16.mxu0 0
  %826 = vmatmul.mubr.bf16.gmra.mrb[0].mxu0 %v603
  %v827 = vpop.f32.mrb[0].mxu0
  %v828 = vadd.f32 0.0, %v827
  %v829 = vpop.f32.mrb[0].mxu0
  %v830 = vadd.f32 0.0, %v829
  %v831 = vpop.f32.mrb[0].mxu0
  %v832 = vadd.f32 0.0, %v831
  %v833 = vpop.f32.mrb[0].mxu0
  %v834 = vadd.f32 0.0, %v833
  %835 = vmatprep.mubr.bf16.mxu0 0
  %836 = vmatmul.mubr.bf16.gmra.mrb[0].mxu0 %v606
  %v837 = vpop.f32.mrb[0].mxu0
  %v838 = vadd.f32 0.0, %v837
  %v839 = vpop.f32.mrb[0].mxu0
  %v840 = vadd.f32 0.0, %v839
  %v841 = vpop.f32.mrb[0].mxu0
  %v842 = vadd.f32 0.0, %v841
  %v843 = vpop.f32.mrb[0].mxu0
  %v844 = vadd.f32 0.0, %v843
  %845 = vmatprep.mubr.bf16.mxu0 0
  %846 = vmatmul.mubr.bf16.gmra.mrb[0].mxu0 %v609
  %v847 = vpop.f32.mrb[0].mxu0
  %v848 = vadd.f32 0.0, %v847
  %v849 = vpop.f32.mrb[0].mxu0
  %v850 = vadd.f32 0.0, %v849
  %v851 = vpop.f32.mrb[0].mxu0
  %v852 = vadd.f32 0.0, %v851
  %v853 = vpop.f32.mrb[0].mxu0
  %v854 = vadd.f32 0.0, %v853
  %855 = vmatprep.mubr.bf16.mxu0 0
  %856 = vmatmul.mubr.bf16.gmra.mrb[0].mxu0 %v612
  %v857 = vpop.f32.mrb[0].mxu0
  %v858 = vadd.f32 0.0, %v857
  %v859 = vpop.f32.mrb[0].mxu0
  %v860 = vadd.f32 0.0, %v859
  %v861 = vpop.f32.mrb[0].mxu0
  %v862 = vadd.f32 0.0, %v861
  %v863 = vpop.f32.mrb[0].mxu0
  %v864 = vadd.f32 0.0, %v863
  %865 = vmatprep.mubr.bf16.mxu0 0
  %866 = vmatmul.mubr.bf16.gmra.mrb[0].mxu0 %v615
  %v867 = vpop.f32.mrb[0].mxu0
  %v868 = vadd.f32 0.0, %v867
  %v869 = vpop.f32.mrb[0].mxu0
  %v870 = vadd.f32 0.0, %v869
  %v871 = vpop.f32.mrb[0].mxu0
  %v872 = vadd.f32 0.0, %v871
  %v873 = vpop.f32.mrb[0].mxu0
  %v874 = vadd.f32 0.0, %v873
  %875 = vmatprep.mubr.bf16.mxu0 0
  %876 = vmatmul.mubr.bf16.gmra.mrb[0].mxu0 %v618
  %v877 = vpop.f32.mrb[0].mxu0
  %v878 = vadd.f32 0.0, %v877
  %v879 = vpop.f32.mrb[0].mxu0
  %v880 = vadd.f32 0.0, %v879
  %v881 = vpop.f32.mrb[0].mxu0
  %v882 = vadd.f32 0.0, %v881
  %v883 = vpop.f32.mrb[0].mxu0
  %v884 = vadd.f32 0.0, %v883
  %885 = vmatprep.mubr.bf16.mxu0 0
  %886 = vmatmul.mubr.bf16.gmra.mrb[0].mxu0 %v621
  %v887 = vpop.f32.mrb[0].mxu0
  %v888 = vadd.f32 0.0, %v887
  %v889 = vpop.f32.mrb[0].mxu0
  %v890 = vadd.f32 0.0, %v889
  %v891 = vpop.f32.mrb[0].mxu0
  %v892 = vadd.f32 0.0, %v891
  %v893 = vpop.f32.mrb[0].mxu0
  %v894 = vadd.f32 0.0, %v893
  %895 = vdwg.mxu0
  %v896 = vld [vmem:[%s4] sm:$0xff]
  %v897 = vld [vmem:[%s4 + $0x8] sm:$0xff]
  %v898 = vld [vmem:[%s4 + $0x10] sm:$0xff]
  %v899 = vld [vmem:[%s4 + $0x18] sm:$0xff]
  %v900 = vld [vmem:[%s4 + $0x20] sm:$0xff]
  %v901 = vld [vmem:[%s4 + $0x28] sm:$0xff]
  %v902 = vld [vmem:[%s4 + $0x30] sm:$0xff]
  %v903 = vld [vmem:[%s4 + $0x38] sm:$0xff]
  %v904 = vld [vmem:[%s4 + $0x40] sm:$0xff]
  %v905 = vld [vmem:[%s4 + $0x48] sm:$0xff]
  %v906 = vld [vmem:[%s4 + $0x50] sm:$0xff]
  %v907 = vld [vmem:[%s4 + $0x58] sm:$0xff]
  %v908 = vld [vmem:[%s4 + $0x60] sm:$0xff]
  %v909 = vld [vmem:[%s4 + $0x68] sm:$0xff]
  %v910 = vld [vmem:[%s4 + $0x70] sm:$0xff]
  %v911 = vld [vmem:[%s4 + $0x78] sm:$0xff]
  %v912 = vld [vmem:[%s4 + $0x80] sm:$0xff]
  %v913 = vld [vmem:[%s4 + $0x88] sm:$0xff]
  %v914 = vld [vmem:[%s4 + $0x90] sm:$0xff]
  %v915 = vld [vmem:[%s4 + $0x98] sm:$0xff]
  %v916 = vld [vmem:[%s4 + $0xa0] sm:$0xff]
  %v917 = vld [vmem:[%s4 + $0xa8] sm:$0xff]
  %v918 = vld [vmem:[%s4 + $0xb0] sm:$0xff]
  %v919 = vld [vmem:[%s4 + $0xb8] sm:$0xff]
  %v920 = vld [vmem:[%s4 + $0xc0] sm:$0xff]
  %v921 = vld [vmem:[%s4 + $0xc8] sm:$0xff]
  %v922 = vld [vmem:[%s4 + $0xd0] sm:$0xff]
  %v923 = vld [vmem:[%s4 + $0xd8] sm:$0xff]
  %v924 = vld [vmem:[%s4 + $0xe0] sm:$0xff]
  %v925 = vld [vmem:[%s4 + $0xe8] sm:$0xff]
  %v926 = vld [vmem:[%s4 + $0xf0] sm:$0xff]
  %v927 = vld [vmem:[%s4 + $0xf8] sm:$0xff]
  %v928 = vld [vmem:[%s4 + $0x100] sm:$0xff]
  %v929 = vld [vmem:[%s4 + $0x108] sm:$0xff]
  %v930 = vld [vmem:[%s4 + $0x110] sm:$0xff]
  %v931 = vld [vmem:[%s4 + $0x118] sm:$0xff]
  %v932 = vld [vmem:[%s4 + $0x120] sm:$0xff]
  %v933 = vld [vmem:[%s4 + $0x128] sm:$0xff]
  %v934 = vld [vmem:[%s4 + $0x130] sm:$0xff]
  %v935 = vld [vmem:[%s4 + $0x138] sm:$0xff]
  %v936 = vld [vmem:[%s4 + $0x140] sm:$0xff]
  %v937 = vld [vmem:[%s4 + $0x148] sm:$0xff]
  %v938 = vld [vmem:[%s4 + $0x150] sm:$0xff]
  %v939 = vld [vmem:[%s4 + $0x158] sm:$0xff]
  %v940 = vld [vmem:[%s4 + $0x160] sm:$0xff]
  %v941 = vld [vmem:[%s4 + $0x168] sm:$0xff]
  %v942 = vld [vmem:[%s4 + $0x170] sm:$0xff]
  %v943 = vld [vmem:[%s4 + $0x178] sm:$0xff]
  %v944 = vsel %vm61, %v660, 0.0
  %v945 = vadd.f32 %v658, %v944
  %946 = vadd.xlane.f32.xlu0 %v945
  %v947 = vpop.xlane.xlu0 %946
  %v948 = vsel %vm61, %v664, 0.0
  %v949 = vadd.f32 %v662, %v948
  %950 = vadd.xlane.f32.xlu0 %v949
  %v951 = vpop.xlane.xlu0 %950
  %v952 = vsel %vm61, %v670, 0.0
  %v953 = vadd.f32 %v668, %v952
  %954 = vadd.xlane.f32.xlu0 %v953
  %v955 = vpop.xlane.xlu0 %954
  %v956 = vsel %vm61, %v674, 0.0
  %v957 = vadd.f32 %v672, %v956
  %958 = vadd.xlane.f32.xlu0 %v957
  %v959 = vpop.xlane.xlu0 %958
  %v960 = vsel %vm61, %v680, 0.0
  %v961 = vadd.f32 %v678, %v960
  %962 = vadd.xlane.f32.xlu0 %v961
  %v963 = vpop.xlane.xlu0 %962
  %v964 = vsel %vm61, %v684, 0.0
  %v965 = vadd.f32 %v682, %v964
  %966 = vadd.xlane.f32.xlu0 %v965
  %v967 = vpop.xlane.xlu0 %966
  %v968 = vsel %vm61, %v690, 0.0
  %v969 = vadd.f32 %v688, %v968
  %970 = vadd.xlane.f32.xlu0 %v969
  %v971 = vpop.xlane.xlu0 %970
  %v972 = vsel %vm61, %v694, 0.0
  %v973 = vadd.f32 %v692, %v972
  %974 = vadd.xlane.f32.xlu0 %v973
  %v975 = vpop.xlane.xlu0 %974
  %v976 = vsel %vm61, %v700, 0.0
  %v977 = vadd.f32 %v698, %v976
  %978 = vadd.xlane.f32.xlu0 %v977
  %v979 = vpop.xlane.xlu0 %978
  %v980 = vsel %vm61, %v704, 0.0
  %v981 = vadd.f32 %v702, %v980
  %982 = vadd.xlane.f32.xlu0 %v981
  %v983 = vpop.xlane.xlu0 %982
  %v984 = vsel %vm61, %v710, 0.0
  %v985 = vadd.f32 %v708, %v984
  %986 = vadd.xlane.f32.xlu0 %v985
  %v987 = vpop.xlane.xlu0 %986
  %v988 = vsel %vm61, %v714, 0.0
  %v989 = vadd.f32 %v712, %v988
  %990 = vadd.xlane.f32.xlu0 %v989
  %v991 = vpop.xlane.xlu0 %990
  %v992 = vsel %vm61, %v720, 0.0
  %v993 = vadd.f32 %v718, %v992
  %994 = vadd.xlane.f32.xlu0 %v993
  %v995 = vpop.xlane.xlu0 %994
  %v996 = vsel %vm61, %v724, 0.0
  %v997 = vadd.f32 %v722, %v996
  %998 = vadd.xlane.f32.xlu0 %v997
  %v999 = vpop.xlane.xlu0 %998
  %v1000 = vsel %vm61, %v730, 0.0
  %v1001 = vadd.f32 %v728, %v1000
  %1002 = vadd.xlane.f32.xlu0 %v1001
  %v1003 = vpop.xlane.xlu0 %1002
  %v1004 = vsel %vm61, %v734, 0.0
  %v1005 = vadd.f32 %v732, %v1004
  %1006 = vadd.xlane.f32.xlu0 %v1005
  %v1007 = vpop.xlane.xlu0 %1006
  %v1008 = vsel %vm61, %v740, 0.0
  %v1009 = vadd.f32 %v738, %v1008
  %1010 = vadd.xlane.f32.xlu0 %v1009
  %v1011 = vpop.xlane.xlu0 %1010
  %v1012 = vsel %vm61, %v744, 0.0
  %v1013 = vadd.f32 %v742, %v1012
  %1014 = vadd.xlane.f32.xlu0 %v1013
  %v1015 = vpop.xlane.xlu0 %1014
  %v1016 = vsel %vm61, %v750, 0.0
  %v1017 = vadd.f32 %v748, %v1016
  %1018 = vadd.xlane.f32.xlu0 %v1017
  %v1019 = vpop.xlane.xlu0 %1018
  %v1020 = vsel %vm61, %v754, 0.0
  %v1021 = vadd.f32 %v752, %v1020
  %1022 = vadd.xlane.f32.xlu0 %v1021
  %v1023 = vpop.xlane.xlu0 %1022
  %v1024 = vsel %vm61, %v760, 0.0
  %v1025 = vadd.f32 %v758, %v1024
  %1026 = vadd.xlane.f32.xlu0 %v1025
  %v1027 = vpop.xlane.xlu0 %1026
  %v1028 = vsel %vm61, %v764, 0.0
  %v1029 = vadd.f32 %v762, %v1028
  %1030 = vadd.xlane.f32.xlu0 %v1029
  %v1031 = vpop.xlane.xlu0 %1030
  %v1032 = vsel %vm61, %v770, 0.0
  %v1033 = vadd.f32 %v768, %v1032
  %1034 = vadd.xlane.f32.xlu0 %v1033
  %v1035 = vpop.xlane.xlu0 %1034
  %v1036 = vsel %vm61, %v774, 0.0
  %v1037 = vadd.f32 %v772, %v1036
  %1038 = vadd.xlane.f32.xlu0 %v1037
  %v1039 = vpop.xlane.xlu0 %1038
  %v1040 = vsel %vm61, %v780, 0.0
  %v1041 = vadd.f32 %v778, %v1040
  %1042 = vadd.xlane.f32.xlu0 %v1041
  %v1043 = vpop.xlane.xlu0 %1042
  %v1044 = vsel %vm61, %v784, 0.0
  %v1045 = vadd.f32 %v782, %v1044
  %1046 = vadd.xlane.f32.xlu0 %v1045
  %v1047 = vpop.xlane.xlu0 %1046
  %v1048 = vsel %vm61, %v790, 0.0
  %v1049 = vadd.f32 %v788, %v1048
  %1050 = vadd.xlane.f32.xlu0 %v1049
  %v1051 = vpop.xlane.xlu0 %1050
  %v1052 = vsel %vm61, %v794, 0.0
  %v1053 = vadd.f32 %v792, %v1052
  %1054 = vadd.xlane.f32.xlu0 %v1053
  %v1055 = vpop.xlane.xlu0 %1054
  %v1056 = vsel %vm61, %v800, 0.0
  %v1057 = vadd.f32 %v798, %v1056
  %1058 = vadd.xlane.f32.xlu0 %v1057
  %v1059 = vpop.xlane.xlu0 %1058
  %v1060 = vsel %vm61, %v804, 0.0
  %v1061 = vadd.f32 %v802, %v1060
  %1062 = vadd.xlane.f32.xlu0 %v1061
  %v1063 = vpop.xlane.xlu0 %1062
  %v1064 = vsel %vm61, %v810, 0.0
  %v1065 = vadd.f32 %v808, %v1064
  %1066 = vadd.xlane.f32.xlu0 %v1065
  %v1067 = vpop.xlane.xlu0 %1066
  %v1068 = vsel %vm61, %v814, 0.0
  %v1069 = vadd.f32 %v812, %v1068
  %1070 = vadd.xlane.f32.xlu0 %v1069
  %v1071 = vpop.xlane.xlu0 %1070
  %v1072 = vsel %vm61, %v820, 0.0
  %v1073 = vadd.f32 %v818, %v1072
  %1074 = vadd.xlane.f32.xlu0 %v1073
  %v1075 = vpop.xlane.xlu0 %1074
  %v1076 = vsel %vm61, %v824, 0.0
  %v1077 = vadd.f32 %v822, %v1076
  %1078 = vadd.xlane.f32.xlu0 %v1077
  %v1079 = vpop.xlane.xlu0 %1078
  %v1080 = vsel %vm61, %v830, 0.0
  %v1081 = vadd.f32 %v828, %v1080
  %1082 = vadd.xlane.f32.xlu0 %v1081
  %v1083 = vpop.xlane.xlu0 %1082
  %v1084 = vsel %vm61, %v834, 0.0
  %v1085 = vadd.f32 %v832, %v1084
  %1086 = vadd.xlane.f32.xlu0 %v1085
  %v1087 = vpop.xlane.xlu0 %1086
  %v1088 = vsel %vm61, %v840, 0.0
  %v1089 = vadd.f32 %v838, %v1088
  %1090 = vadd.xlane.f32.xlu0 %v1089
  %v1091 = vpop.xlane.xlu0 %1090
  %v1092 = vsel %vm61, %v844, 0.0
  %v1093 = vadd.f32 %v842, %v1092
  %1094 = vadd.xlane.f32.xlu0 %v1093
  %v1095 = vpop.xlane.xlu0 %1094
  %v1096 = vsel %vm61, %v850, 0.0
  %v1097 = vadd.f32 %v848, %v1096
  %1098 = vadd.xlane.f32.xlu0 %v1097
  %v1099 = vpop.xlane.xlu0 %1098
  %v1100 = vsel %vm61, %v854, 0.0
  %v1101 = vadd.f32 %v852, %v1100
  %1102 = vadd.xlane.f32.xlu0 %v1101
  %v1103 = vpop.xlane.xlu0 %1102
  %v1104 = vsel %vm61, %v860, 0.0
  %v1105 = vadd.f32 %v858, %v1104
  %1106 = vadd.xlane.f32.xlu0 %v1105
  %v1107 = vpop.xlane.xlu0 %1106
  %v1108 = vsel %vm61, %v864, 0.0
  %v1109 = vadd.f32 %v862, %v1108
  %1110 = vadd.xlane.f32.xlu0 %v1109
  %v1111 = vpop.xlane.xlu0 %1110
  %v1112 = vsel %vm61, %v870, 0.0
  %v1113 = vadd.f32 %v868, %v1112
  %1114 = vadd.xlane.f32.xlu0 %v1113
  %v1115 = vpop.xlane.xlu0 %1114
  %v1116 = vsel %vm61, %v874, 0.0
  %v1117 = vadd.f32 %v872, %v1116
  %1118 = vadd.xlane.f32.xlu0 %v1117
  %v1119 = vpop.xlane.xlu0 %1118
  %v1120 = vsel %vm61, %v880, 0.0
  %v1121 = vadd.f32 %v878, %v1120
  %1122 = vadd.xlane.f32.xlu0 %v1121
  %v1123 = vpop.xlane.xlu0 %1122
  %v1124 = vsel %vm61, %v884, 0.0
  %v1125 = vadd.f32 %v882, %v1124
  %1126 = vadd.xlane.f32.xlu0 %v1125
  %v1127 = vpop.xlane.xlu0 %1126
  %v1128 = vsel %vm61, %v890, 0.0
  %v1129 = vadd.f32 %v888, %v1128
  %1130 = vadd.xlane.f32.xlu0 %v1129
  %v1131 = vpop.xlane.xlu0 %1130
  %v1132 = vsel %vm61, %v894, 0.0
  %v1133 = vadd.f32 %v892, %v1132
  %1134 = vadd.xlane.f32.xlu0 %v1133
  %v1135 = vpop.xlane.xlu0 %1134
  %v1136 = vmul.f32 %v947, 0.0051020407
  %v1137 = vmul.f32 %v951, 0.0051020407
  %v1138 = vmul.f32 %v955, 0.0051020407
  %v1139 = vmul.f32 %v959, 0.0051020407
  %v1140 = vmul.f32 %v963, 0.0051020407
  %v1141 = vmul.f32 %v967, 0.0051020407
  %v1142 = vmul.f32 %v971, 0.0051020407
  %v1143 = vmul.f32 %v975, 0.0051020407
  %v1144 = vmul.f32 %v979, 0.0051020407
  %v1145 = vmul.f32 %v983, 0.0051020407
  %v1146 = vmul.f32 %v987, 0.0051020407
  %v1147 = vmul.f32 %v991, 0.0051020407
  %v1148 = vmul.f32 %v995, 0.0051020407
  %v1149 = vmul.f32 %v999, 0.0051020407
  %v1150 = vmul.f32 %v1003, 0.0051020407
  %v1151 = vmul.f32 %v1007, 0.0051020407
  %v1152 = vmul.f32 %v1011, 0.0051020407
  %v1153 = vmul.f32 %v1015, 0.0051020407
  %v1154 = vmul.f32 %v1019, 0.0051020407
  %v1155 = vmul.f32 %v1023, 0.0051020407
  %v1156 = vmul.f32 %v1027, 0.0051020407
  %v1157 = vmul.f32 %v1031, 0.0051020407
  %v1158 = vmul.f32 %v1035, 0.0051020407
  %v1159 = vmul.f32 %v1039, 0.0051020407
  %v1160 = vmul.f32 %v1043, 0.0051020407
  %v1161 = vmul.f32 %v1047, 0.0051020407
  %v1162 = vmul.f32 %v1051, 0.0051020407
  %v1163 = vmul.f32 %v1055, 0.0051020407
  %v1164 = vmul.f32 %v1059, 0.0051020407
  %v1165 = vmul.f32 %v1063, 0.0051020407
  %v1166 = vmul.f32 %v1067, 0.0051020407
  %v1167 = vmul.f32 %v1071, 0.0051020407
  %v1168 = vmul.f32 %v1075, 0.0051020407
  %v1169 = vmul.f32 %v1079, 0.0051020407
  %v1170 = vmul.f32 %v1083, 0.0051020407
  %v1171 = vmul.f32 %v1087, 0.0051020407
  %v1172 = vmul.f32 %v1091, 0.0051020407
  %v1173 = vmul.f32 %v1095, 0.0051020407
  %v1174 = vmul.f32 %v1099, 0.0051020407
  %v1175 = vmul.f32 %v1103, 0.0051020407
  %v1176 = vmul.f32 %v1107, 0.0051020407
  %v1177 = vmul.f32 %v1111, 0.0051020407
  %v1178 = vmul.f32 %v1115, 0.0051020407
  %v1179 = vmul.f32 %v1119, 0.0051020407
  %v1180 = vmul.f32 %v1123, 0.0051020407
  %v1181 = vmul.f32 %v1127, 0.0051020407
  %v1182 = vmul.f32 %v1131, 0.0051020407
  %v1183 = vmul.f32 %v1135, 0.0051020407
  %v1184 = vsub.f32 %v658, %v1136
  %v1185 = vsub.f32 %v660, %v1136
  %v1186 = vsub.f32 %v662, %v1137
  %v1187 = vsub.f32 %v664, %v1137
  %v1188 = vsub.f32 %v668, %v1138
  %v1189 = vsub.f32 %v670, %v1138
  %v1190 = vsub.f32 %v672, %v1139
  %v1191 = vsub.f32 %v674, %v1139
  %v1192 = vsub.f32 %v678, %v1140
  %v1193 = vsub.f32 %v680, %v1140
  %v1194 = vsub.f32 %v682, %v1141
  %v1195 = vsub.f32 %v684, %v1141
  %v1196 = vsub.f32 %v688, %v1142
  %v1197 = vsub.f32 %v690, %v1142
  %v1198 = vsub.f32 %v692, %v1143
  %v1199 = vsub.f32 %v694, %v1143
  %v1200 = vsub.f32 %v698, %v1144
  %v1201 = vsub.f32 %v700, %v1144
  %v1202 = vsub.f32 %v702, %v1145
  %v1203 = vsub.f32 %v704, %v1145
  %v1204 = vsub.f32 %v708, %v1146
  %v1205 = vsub.f32 %v710, %v1146
  %v1206 = vsub.f32 %v712, %v1147
  %v1207 = vsub.f32 %v714, %v1147
  %v1208 = vsub.f32 %v718, %v1148
  %v1209 = vsub.f32 %v720, %v1148
  %v1210 = vsub.f32 %v722, %v1149
  %v1211 = vsub.f32 %v724, %v1149
  %v1212 = vsub.f32 %v728, %v1150
  %v1213 = vsub.f32 %v730, %v1150
  %v1214 = vsub.f32 %v732, %v1151
  %v1215 = vsub.f32 %v734, %v1151
  %v1216 = vsub.f32 %v738, %v1152
  %v1217 = vsub.f32 %v740, %v1152
  %v1218 = vsub.f32 %v742, %v1153
  %v1219 = vsub.f32 %v744, %v1153
  %v1220 = vsub.f32 %v748, %v1154
  %v1221 = vsub.f32 %v750, %v1154
  %v1222 = vsub.f32 %v752, %v1155
  %v1223 = vsub.f32 %v754, %v1155
  %v1224 = vsub.f32 %v758, %v1156
  %v1225 = vsub.f32 %v760, %v1156
  %v1226 = vsub.f32 %v762, %v1157
  %v1227 = vsub.f32 %v764, %v1157
  %v1228 = vsub.f32 %v768, %v1158
  %v1229 = vsub.f32 %v770, %v1158
  %v1230 = vsub.f32 %v772, %v1159
  %v1231 = vsub.f32 %v774, %v1159
  %v1232 = vsub.f32 %v778, %v1160
  %v1233 = vsub.f32 %v780, %v1160
  %v1234 = vsub.f32 %v782, %v1161
  %v1235 = vsub.f32 %v784, %v1161
  %v1236 = vsub.f32 %v788, %v1162
  %v1237 = vsub.f32 %v790, %v1162
  %v1238 = vsub.f32 %v792, %v1163
  %v1239 = vsub.f32 %v794, %v1163
  %v1240 = vsub.f32 %v798, %v1164
  %v1241 = vsub.f32 %v800, %v1164
  %v1242 = vsub.f32 %v802, %v1165
  %v1243 = vsub.f32 %v804, %v1165
  %v1244 = vsub.f32 %v808, %v1166
  %v1245 = vsub.f32 %v810, %v1166
  %v1246 = vsub.f32 %v812, %v1167
  %v1247 = vsub.f32 %v814, %v1167
  %v1248 = vsub.f32 %v818, %v1168
  %v1249 = vsub.f32 %v820, %v1168
  %v1250 = vsub.f32 %v822, %v1169
  %v1251 = vsub.f32 %v824, %v1169
  %v1252 = vsub.f32 %v828, %v1170
  %v1253 = vsub.f32 %v830, %v1170
  %v1254 = vsub.f32 %v832, %v1171
  %v1255 = vsub.f32 %v834, %v1171
  %v1256 = vsub.f32 %v838, %v1172
  %v1257 = vsub.f32 %v840, %v1172
  %v1258 = vsub.f32 %v842, %v1173
  %v1259 = vsub.f32 %v844, %v1173
  %v1260 = vsub.f32 %v848, %v1174
  %v1261 = vsub.f32 %v850, %v1174
  %v1262 = vsub.f32 %v852, %v1175
  %v1263 = vsub.f32 %v854, %v1175
  %v1264 = vsub.f32 %v858, %v1176
  %v1265 = vsub.f32 %v860, %v1176
  %v1266 = vsub.f32 %v862, %v1177
  %v1267 = vsub.f32 %v864, %v1177
  %v1268 = vsub.f32 %v868, %v1178
  %v1269 = vsub.f32 %v870, %v1178
  %v1270 = vsub.f32 %v872, %v1179
  %v1271 = vsub.f32 %v874, %v1179
  %v1272 = vsub.f32 %v878, %v1180
  %v1273 = vsub.f32 %v880, %v1180
  %v1274 = vsub.f32 %v882, %v1181
  %v1275 = vsub.f32 %v884, %v1181
  %v1276 = vsub.f32 %v888, %v1182
  %v1277 = vsub.f32 %v890, %v1182
  %v1278 = vsub.f32 %v892, %v1183
  %v1279 = vsub.f32 %v894, %v1183
  %v1280 = vmul.f32 %v1184, %v1184
  %v1281 = vmul.f32 %v1185, %v1185
  %v1282 = vmul.f32 %v1186, %v1186
  %v1283 = vmul.f32 %v1187, %v1187
  %v1284 = vmul.f32 %v1188, %v1188
  %v1285 = vmul.f32 %v1189, %v1189
  %v1286 = vmul.f32 %v1190, %v1190
  %v1287 = vmul.f32 %v1191, %v1191
  %v1288 = vmul.f32 %v1192, %v1192
  %v1289 = vmul.f32 %v1193, %v1193
  %v1290 = vmul.f32 %v1194, %v1194
  %v1291 = vmul.f32 %v1195, %v1195
  %v1292 = vmul.f32 %v1196, %v1196
  %v1293 = vmul.f32 %v1197, %v1197
  %v1294 = vmul.f32 %v1198, %v1198
  %v1295 = vmul.f32 %v1199, %v1199
  %v1296 = vmul.f32 %v1200, %v1200
  %v1297 = vmul.f32 %v1201, %v1201
  %v1298 = vmul.f32 %v1202, %v1202
  %v1299 = vmul.f32 %v1203, %v1203
  %v1300 = vmul.f32 %v1204, %v1204
  %v1301 = vmul.f32 %v1205, %v1205
  %v1302 = vmul.f32 %v1206, %v1206
  %v1303 = vmul.f32 %v1207, %v1207
  %v1304 = vmul.f32 %v1208, %v1208
  %v1305 = vmul.f32 %v1209, %v1209
  %v1306 = vmul.f32 %v1210, %v1210
  %v1307 = vmul.f32 %v1211, %v1211
  %v1308 = vmul.f32 %v1212, %v1212
  %v1309 = vmul.f32 %v1213, %v1213
  %v1310 = vmul.f32 %v1214, %v1214
  %v1311 = vmul.f32 %v1215, %v1215
  %v1312 = vmul.f32 %v1216, %v1216
  %v1313 = vmul.f32 %v1217, %v1217
  %v1314 = vmul.f32 %v1218, %v1218
  %v1315 = vmul.f32 %v1219, %v1219
  %v1316 = vmul.f32 %v1220, %v1220
  %v1317 = vmul.f32 %v1221, %v1221
  %v1318 = vmul.f32 %v1222, %v1222
  %v1319 = vmul.f32 %v1223, %v1223
  %v1320 = vmul.f32 %v1224, %v1224
  %v1321 = vmul.f32 %v1225, %v1225
  %v1322 = vmul.f32 %v1226, %v1226
  %v1323 = vmul.f32 %v1227, %v1227
  %v1324 = vmul.f32 %v1228, %v1228
  %v1325 = vmul.f32 %v1229, %v1229
  %v1326 = vmul.f32 %v1230, %v1230
  %v1327 = vmul.f32 %v1231, %v1231
  %v1328 = vmul.f32 %v1232, %v1232
  %v1329 = vmul.f32 %v1233, %v1233
  %v1330 = vmul.f32 %v1234, %v1234
  %v1331 = vmul.f32 %v1235, %v1235
  %v1332 = vmul.f32 %v1236, %v1236
  %v1333 = vmul.f32 %v1237, %v1237
  %v1334 = vmul.f32 %v1238, %v1238
  %v1335 = vmul.f32 %v1239, %v1239
  %v1336 = vmul.f32 %v1240, %v1240
  %v1337 = vmul.f32 %v1241, %v1241
  %v1338 = vmul.f32 %v1242, %v1242
  %v1339 = vmul.f32 %v1243, %v1243
  %v1340 = vmul.f32 %v1244, %v1244
  %v1341 = vmul.f32 %v1245, %v1245
  %v1342 = vmul.f32 %v1246, %v1246
  %v1343 = vmul.f32 %v1247, %v1247
  %v1344 = vmul.f32 %v1248, %v1248
  %v1345 = vmul.f32 %v1249, %v1249
  %v1346 = vmul.f32 %v1250, %v1250
  %v1347 = vmul.f32 %v1251, %v1251
  %v1348 = vmul.f32 %v1252, %v1252
  %v1349 = vmul.f32 %v1253, %v1253
  %v1350 = vmul.f32 %v1254, %v1254
  %v1351 = vmul.f32 %v1255, %v1255
  %v1352 = vmul.f32 %v1256, %v1256
  %v1353 = vmul.f32 %v1257, %v1257
  %v1354 = vmul.f32 %v1258, %v1258
  %v1355 = vmul.f32 %v1259, %v1259
  %v1356 = vmul.f32 %v1260, %v1260
  %v1357 = vmul.f32 %v1261, %v1261
  %v1358 = vmul.f32 %v1262, %v1262
  %v1359 = vmul.f32 %v1263, %v1263
  %v1360 = vmul.f32 %v1264, %v1264
  %v1361 = vmul.f32 %v1265, %v1265
  %v1362 = vmul.f32 %v1266, %v1266
  %v1363 = vmul.f32 %v1267, %v1267
  %v1364 = vmul.f32 %v1268, %v1268
  %v1365 = vmul.f32 %v1269, %v1269
  %v1366 = vmul.f32 %v1270, %v1270
  %v1367 = vmul.f32 %v1271, %v1271
  %v1368 = vmul.f32 %v1272, %v1272
  %v1369 = vmul.f32 %v1273, %v1273
  %v1370 = vmul.f32 %v1274, %v1274
  %v1371 = vmul.f32 %v1275, %v1275
  %v1372 = vmul.f32 %v1276, %v1276
  %v1373 = vmul.f32 %v1277, %v1277
  %v1374 = vmul.f32 %v1278, %v1278
  %v1375 = vmul.f32 %v1279, %v1279
  %v1376 = vsel %vm61, %v1281, 0.0
  %v1377 = vadd.f32 %v1280, %v1376
  %1378 = vadd.xlane.f32.xlu0 %v1377
  %v1379 = vpop.xlane.xlu0 %1378
  %v1380 = vsel %vm61, %v1283, 0.0
  %v1381 = vadd.f32 %v1282, %v1380
  %1382 = vadd.xlane.f32.xlu0 %v1381
  %v1383 = vpop.xlane.xlu0 %1382
  %v1384 = vsel %vm61, %v1285, 0.0
  %v1385 = vadd.f32 %v1284, %v1384
  %1386 = vadd.xlane.f32.xlu0 %v1385
  %v1387 = vpop.xlane.xlu0 %1386
  %v1388 = vsel %vm61, %v1287, 0.0
  %v1389 = vadd.f32 %v1286, %v1388
  %1390 = vadd.xlane.f32.xlu0 %v1389
  %v1391 = vpop.xlane.xlu0 %1390
  %v1392 = vsel %vm61, %v1289, 0.0
  %v1393 = vadd.f32 %v1288, %v1392
  %1394 = vadd.xlane.f32.xlu0 %v1393
  %v1395 = vpop.xlane.xlu0 %1394
  %v1396 = vsel %vm61, %v1291, 0.0
  %v1397 = vadd.f32 %v1290, %v1396
  %1398 = vadd.xlane.f32.xlu0 %v1397
  %v1399 = vpop.xlane.xlu0 %1398
  %v1400 = vsel %vm61, %v1293, 0.0
  %v1401 = vadd.f32 %v1292, %v1400
  %1402 = vadd.xlane.f32.xlu0 %v1401
  %v1403 = vpop.xlane.xlu0 %1402
  %v1404 = vsel %vm61, %v1295, 0.0
  %v1405 = vadd.f32 %v1294, %v1404
  %1406 = vadd.xlane.f32.xlu0 %v1405
  %v1407 = vpop.xlane.xlu0 %1406
  %v1408 = vsel %vm61, %v1297, 0.0
  %v1409 = vadd.f32 %v1296, %v1408
  %1410 = vadd.xlane.f32.xlu0 %v1409
  %v1411 = vpop.xlane.xlu0 %1410
  %v1412 = vsel %vm61, %v1299, 0.0
  %v1413 = vadd.f32 %v1298, %v1412
  %1414 = vadd.xlane.f32.xlu0 %v1413
  %v1415 = vpop.xlane.xlu0 %1414
  %v1416 = vsel %vm61, %v1301, 0.0
  %v1417 = vadd.f32 %v1300, %v1416
  %1418 = vadd.xlane.f32.xlu0 %v1417
  %v1419 = vpop.xlane.xlu0 %1418
  %v1420 = vsel %vm61, %v1303, 0.0
  %v1421 = vadd.f32 %v1302, %v1420
  %1422 = vadd.xlane.f32.xlu0 %v1421
  %v1423 = vpop.xlane.xlu0 %1422
  %v1424 = vsel %vm61, %v1305, 0.0
  %v1425 = vadd.f32 %v1304, %v1424
  %1426 = vadd.xlane.f32.xlu0 %v1425
  %v1427 = vpop.xlane.xlu0 %1426
  %v1428 = vsel %vm61, %v1307, 0.0
  %v1429 = vadd.f32 %v1306, %v1428
  %1430 = vadd.xlane.f32.xlu0 %v1429
  %v1431 = vpop.xlane.xlu0 %1430
  %v1432 = vsel %vm61, %v1309, 0.0
  %v1433 = vadd.f32 %v1308, %v1432
  %1434 = vadd.xlane.f32.xlu0 %v1433
  %v1435 = vpop.xlane.xlu0 %1434
  %v1436 = vsel %vm61, %v1311, 0.0
  %v1437 = vadd.f32 %v1310, %v1436
  %1438 = vadd.xlane.f32.xlu0 %v1437
  %v1439 = vpop.xlane.xlu0 %1438
  %v1440 = vsel %vm61, %v1313, 0.0
  %v1441 = vadd.f32 %v1312, %v1440
  %1442 = vadd.xlane.f32.xlu0 %v1441
  %v1443 = vpop.xlane.xlu0 %1442
  %v1444 = vsel %vm61, %v1315, 0.0
  %v1445 = vadd.f32 %v1314, %v1444
  %1446 = vadd.xlane.f32.xlu0 %v1445
  %v1447 = vpop.xlane.xlu0 %1446
  %v1448 = vsel %vm61, %v1317, 0.0
  %v1449 = vadd.f32 %v1316, %v1448
  %1450 = vadd.xlane.f32.xlu0 %v1449
  %v1451 = vpop.xlane.xlu0 %1450
  %v1452 = vsel %vm61, %v1319, 0.0
  %v1453 = vadd.f32 %v1318, %v1452
  %1454 = vadd.xlane.f32.xlu0 %v1453
  %v1455 = vpop.xlane.xlu0 %1454
  %v1456 = vsel %vm61, %v1321, 0.0
  %v1457 = vadd.f32 %v1320, %v1456
  %1458 = vadd.xlane.f32.xlu0 %v1457
  %v1459 = vpop.xlane.xlu0 %1458
  %v1460 = vsel %vm61, %v1323, 0.0
  %v1461 = vadd.f32 %v1322, %v1460
  %1462 = vadd.xlane.f32.xlu0 %v1461
  %v1463 = vpop.xlane.xlu0 %1462
  %v1464 = vsel %vm61, %v1325, 0.0
  %v1465 = vadd.f32 %v1324, %v1464
  %1466 = vadd.xlane.f32.xlu0 %v1465
  %v1467 = vpop.xlane.xlu0 %1466
  %v1468 = vsel %vm61, %v1327, 0.0
  %v1469 = vadd.f32 %v1326, %v1468
  %1470 = vadd.xlane.f32.xlu0 %v1469
  %v1471 = vpop.xlane.xlu0 %1470
  %v1472 = vsel %vm61, %v1329, 0.0
  %v1473 = vadd.f32 %v1328, %v1472
  %1474 = vadd.xlane.f32.xlu0 %v1473
  %v1475 = vpop.xlane.xlu0 %1474
  %v1476 = vsel %vm61, %v1331, 0.0
  %v1477 = vadd.f32 %v1330, %v1476
  %1478 = vadd.xlane.f32.xlu0 %v1477
  %v1479 = vpop.xlane.xlu0 %1478
  %v1480 = vsel %vm61, %v1333, 0.0
  %v1481 = vadd.f32 %v1332, %v1480
  %1482 = vadd.xlane.f32.xlu0 %v1481
  %v1483 = vpop.xlane.xlu0 %1482
  %v1484 = vsel %vm61, %v1335, 0.0
  %v1485 = vadd.f32 %v1334, %v1484
  %1486 = vadd.xlane.f32.xlu0 %v1485
  %v1487 = vpop.xlane.xlu0 %1486
  %v1488 = vsel %vm61, %v1337, 0.0
  %v1489 = vadd.f32 %v1336, %v1488
  %1490 = vadd.xlane.f32.xlu0 %v1489
  %v1491 = vpop.xlane.xlu0 %1490
  %v1492 = vsel %vm61, %v1339, 0.0
  %v1493 = vadd.f32 %v1338, %v1492
  %1494 = vadd.xlane.f32.xlu0 %v1493
  %v1495 = vpop.xlane.xlu0 %1494
  %v1496 = vsel %vm61, %v1341, 0.0
  %v1497 = vadd.f32 %v1340, %v1496
  %1498 = vadd.xlane.f32.xlu0 %v1497
  %v1499 = vpop.xlane.xlu0 %1498
  %v1500 = vsel %vm61, %v1343, 0.0
  %v1501 = vadd.f32 %v1342, %v1500
  %1502 = vadd.xlane.f32.xlu0 %v1501
  %v1503 = vpop.xlane.xlu0 %1502
  %v1504 = vsel %vm61, %v1345, 0.0
  %v1505 = vadd.f32 %v1344, %v1504
  %1506 = vadd.xlane.f32.xlu0 %v1505
  %v1507 = vpop.xlane.xlu0 %1506
  %v1508 = vsel %vm61, %v1347, 0.0
  %v1509 = vadd.f32 %v1346, %v1508
  %1510 = vadd.xlane.f32.xlu0 %v1509
  %v1511 = vpop.xlane.xlu0 %1510
  %v1512 = vsel %vm61, %v1349, 0.0
  %v1513 = vadd.f32 %v1348, %v1512
  %1514 = vadd.xlane.f32.xlu0 %v1513
  %v1515 = vpop.xlane.xlu0 %1514
  %v1516 = vsel %vm61, %v1351, 0.0
  %v1517 = vadd.f32 %v1350, %v1516
  %1518 = vadd.xlane.f32.xlu0 %v1517
  %v1519 = vpop.xlane.xlu0 %1518
  %v1520 = vsel %vm61, %v1353, 0.0
  %v1521 = vadd.f32 %v1352, %v1520
  %1522 = vadd.xlane.f32.xlu0 %v1521
  %v1523 = vpop.xlane.xlu0 %1522
  %v1524 = vsel %vm61, %v1355, 0.0
  %v1525 = vadd.f32 %v1354, %v1524
  %1526 = vadd.xlane.f32.xlu0 %v1525
  %v1527 = vpop.xlane.xlu0 %1526
  %v1528 = vsel %vm61, %v1357, 0.0
  %v1529 = vadd.f32 %v1356, %v1528
  %1530 = vadd.xlane.f32.xlu0 %v1529
  %v1531 = vpop.xlane.xlu0 %1530
  %v1532 = vsel %vm61, %v1359, 0.0
  %v1533 = vadd.f32 %v1358, %v1532
  %1534 = vadd.xlane.f32.xlu0 %v1533
  %v1535 = vpop.xlane.xlu0 %1534
  %v1536 = vsel %vm61, %v1361, 0.0
  %v1537 = vadd.f32 %v1360, %v1536
  %1538 = vadd.xlane.f32.xlu0 %v1537
  %v1539 = vpop.xlane.xlu0 %1538
  %v1540 = vsel %vm61, %v1363, 0.0
  %v1541 = vadd.f32 %v1362, %v1540
  %1542 = vadd.xlane.f32.xlu0 %v1541
  %v1543 = vpop.xlane.xlu0 %1542
  %v1544 = vsel %vm61, %v1365, 0.0
  %v1545 = vadd.f32 %v1364, %v1544
  %1546 = vadd.xlane.f32.xlu0 %v1545
  %v1547 = vpop.xlane.xlu0 %1546
  %v1548 = vsel %vm61, %v1367, 0.0
  %v1549 = vadd.f32 %v1366, %v1548
  %1550 = vadd.xlane.f32.xlu0 %v1549
  %v1551 = vpop.xlane.xlu0 %1550
  %v1552 = vsel %vm61, %v1369, 0.0
  %v1553 = vadd.f32 %v1368, %v1552
  %1554 = vadd.xlane.f32.xlu0 %v1553
  %v1555 = vpop.xlane.xlu0 %1554
  %v1556 = vsel %vm61, %v1371, 0.0
  %v1557 = vadd.f32 %v1370, %v1556
  %1558 = vadd.xlane.f32.xlu0 %v1557
  %v1559 = vpop.xlane.xlu0 %1558
  %v1560 = vsel %vm61, %v1373, 0.0
  %v1561 = vadd.f32 %v1372, %v1560
  %1562 = vadd.xlane.f32.xlu0 %v1561
  %v1563 = vpop.xlane.xlu0 %1562
  %v1564 = vsel %vm61, %v1375, 0.0
  %v1565 = vadd.f32 %v1374, %v1564
  %1566 = vadd.xlane.f32.xlu0 %v1565
  %v1567 = vpop.xlane.xlu0 %1566
  %v1568 = vmul.f32 %v1379, 0.0051020407
  %v1569 = vmul.f32 %v1383, 0.0051020407
  %v1570 = vmul.f32 %v1387, 0.0051020407
  %v1571 = vmul.f32 %v1391, 0.0051020407
  %v1572 = vmul.f32 %v1395, 0.0051020407
  %v1573 = vmul.f32 %v1399, 0.0051020407
  %v1574 = vmul.f32 %v1403, 0.0051020407
  %v1575 = vmul.f32 %v1407, 0.0051020407
  %v1576 = vmul.f32 %v1411, 0.0051020407
  %v1577 = vmul.f32 %v1415, 0.0051020407
  %v1578 = vmul.f32 %v1419, 0.0051020407
  %v1579 = vmul.f32 %v1423, 0.0051020407
  %v1580 = vmul.f32 %v1427, 0.0051020407
  %v1581 = vmul.f32 %v1431, 0.0051020407
  %v1582 = vmul.f32 %v1435, 0.0051020407
  %v1583 = vmul.f32 %v1439, 0.0051020407
  %v1584 = vmul.f32 %v1443, 0.0051020407
  %v1585 = vmul.f32 %v1447, 0.0051020407
  %v1586 = vmul.f32 %v1451, 0.0051020407
  %v1587 = vmul.f32 %v1455, 0.0051020407
  %v1588 = vmul.f32 %v1459, 0.0051020407
  %v1589 = vmul.f32 %v1463, 0.0051020407
  %v1590 = vmul.f32 %v1467, 0.0051020407
  %v1591 = vmul.f32 %v1471, 0.0051020407
  %v1592 = vmul.f32 %v1475, 0.0051020407
  %v1593 = vmul.f32 %v1479, 0.0051020407
  %v1594 = vmul.f32 %v1483, 0.0051020407
  %v1595 = vmul.f32 %v1487, 0.0051020407
  %v1596 = vmul.f32 %v1491, 0.0051020407
  %v1597 = vmul.f32 %v1495, 0.0051020407
  %v1598 = vmul.f32 %v1499, 0.0051020407
  %v1599 = vmul.f32 %v1503, 0.0051020407
  %v1600 = vmul.f32 %v1507, 0.0051020407
  %v1601 = vmul.f32 %v1511, 0.0051020407
  %v1602 = vmul.f32 %v1515, 0.0051020407
  %v1603 = vmul.f32 %v1519, 0.0051020407
  %v1604 = vmul.f32 %v1523, 0.0051020407
  %v1605 = vmul.f32 %v1527, 0.0051020407
  %v1606 = vmul.f32 %v1531, 0.0051020407
  %v1607 = vmul.f32 %v1535, 0.0051020407
  %v1608 = vmul.f32 %v1539, 0.0051020407
  %v1609 = vmul.f32 %v1543, 0.0051020407
  %v1610 = vmul.f32 %v1547, 0.0051020407
  %v1611 = vmul.f32 %v1551, 0.0051020407
  %v1612 = vmul.f32 %v1555, 0.0051020407
  %v1613 = vmul.f32 %v1559, 0.0051020407
  %v1614 = vmul.f32 %v1563, 0.0051020407
  %v1615 = vmul.f32 %v1567, 0.0051020407
  %v1616 = vadd.f32 %v1568, 0.001
  %v1617 = vadd.f32 %v1569, 0.001
  %v1618 = vadd.f32 %v1570, 0.001
  %v1619 = vadd.f32 %v1571, 0.001
  %v1620 = vadd.f32 %v1572, 0.001
  %v1621 = vadd.f32 %v1573, 0.001
  %v1622 = vadd.f32 %v1574, 0.001
  %v1623 = vadd.f32 %v1575, 0.001
  %v1624 = vadd.f32 %v1576, 0.001
  %v1625 = vadd.f32 %v1577, 0.001
  %v1626 = vadd.f32 %v1578, 0.001
  %v1627 = vadd.f32 %v1579, 0.001
  %v1628 = vadd.f32 %v1580, 0.001
  %v1629 = vadd.f32 %v1581, 0.001
  %v1630 = vadd.f32 %v1582, 0.001
  %v1631 = vadd.f32 %v1583, 0.001
  %v1632 = vadd.f32 %v1584, 0.001
  %v1633 = vadd.f32 %v1585, 0.001
  %v1634 = vadd.f32 %v1586, 0.001
  %v1635 = vadd.f32 %v1587, 0.001
  %v1636 = vadd.f32 %v1588, 0.001
  %v1637 = vadd.f32 %v1589, 0.001
  %v1638 = vadd.f32 %v1590, 0.001
  %v1639 = vadd.f32 %v1591, 0.001
  %v1640 = vadd.f32 %v1592, 0.001
  %v1641 = vadd.f32 %v1593, 0.001
  %v1642 = vadd.f32 %v1594, 0.001
  %v1643 = vadd.f32 %v1595, 0.001
  %v1644 = vadd.f32 %v1596, 0.001
  %v1645 = vadd.f32 %v1597, 0.001
  %v1646 = vadd.f32 %v1598, 0.001
  %v1647 = vadd.f32 %v1599, 0.001
  %v1648 = vadd.f32 %v1600, 0.001
  %v1649 = vadd.f32 %v1601, 0.001
  %v1650 = vadd.f32 %v1602, 0.001
  %v1651 = vadd.f32 %v1603, 0.001
  %v1652 = vadd.f32 %v1604, 0.001
  %v1653 = vadd.f32 %v1605, 0.001
  %v1654 = vadd.f32 %v1606, 0.001
  %v1655 = vadd.f32 %v1607, 0.001
  %v1656 = vadd.f32 %v1608, 0.001
  %v1657 = vadd.f32 %v1609, 0.001
  %v1658 = vadd.f32 %v1610, 0.001
  %v1659 = vadd.f32 %v1611, 0.001
  %v1660 = vadd.f32 %v1612, 0.001
  %v1661 = vadd.f32 %v1613, 0.001
  %v1662 = vadd.f32 %v1614, 0.001
  %v1663 = vadd.f32 %v1615, 0.001
  %v1664 = vrsqrt.pop %v1616
  %v1665 = vrsqrt.pop %v1617
  %v1666 = vrsqrt.pop %v1618
  %v1667 = vrsqrt.pop %v1619
  %v1668 = vrsqrt.pop %v1620
  %v1669 = vrsqrt.pop %v1621
  %v1670 = vrsqrt.pop %v1622
  %v1671 = vrsqrt.pop %v1623
  %v1672 = vrsqrt.pop %v1624
  %v1673 = vrsqrt.pop %v1625
  %v1674 = vrsqrt.pop %v1626
  %v1675 = vrsqrt.pop %v1627
  %v1676 = vrsqrt.pop %v1628
  %v1677 = vrsqrt.pop %v1629
  %v1678 = vrsqrt.pop %v1630
  %v1679 = vrsqrt.pop %v1631
  %v1680 = vrsqrt.pop %v1632
  %v1681 = vrsqrt.pop %v1633
  %v1682 = vrsqrt.pop %v1634
  %v1683 = vrsqrt.pop %v1635
  %v1684 = vrsqrt.pop %v1636
  %v1685 = vrsqrt.pop %v1637
  %v1686 = vrsqrt.pop %v1638
  %v1687 = vrsqrt.pop %v1639
  %v1688 = vrsqrt.pop %v1640
  %v1689 = vrsqrt.pop %v1641
  %v1690 = vrsqrt.pop %v1642
  %v1691 = vrsqrt.pop %v1643
  %v1692 = vrsqrt.pop %v1644
  %v1693 = vrsqrt.pop %v1645
  %v1694 = vrsqrt.pop %v1646
  %v1695 = vrsqrt.pop %v1647
  %v1696 = vrsqrt.pop %v1648
  %v1697 = vrsqrt.pop %v1649
  %v1698 = vrsqrt.pop %v1650
  %v1699 = vrsqrt.pop %v1651
  %v1700 = vrsqrt.pop %v1652
  %v1701 = vrsqrt.pop %v1653
  %v1702 = vrsqrt.pop %v1654
  %v1703 = vrsqrt.pop %v1655
  %v1704 = vrsqrt.pop %v1656
  %v1705 = vrsqrt.pop %v1657
  %v1706 = vrsqrt.pop %v1658
  %v1707 = vrsqrt.pop %v1659
  %v1708 = vrsqrt.pop %v1660
  %v1709 = vrsqrt.pop %v1661
  %v1710 = vrsqrt.pop %v1662
  %v1711 = vrsqrt.pop %v1663
  %v1712 = vmul.f32 %v896, %v1664
  %v1713 = vmul.f32 %v897, %v1665
  %v1714 = vmul.f32 %v898, %v1666
  %v1715 = vmul.f32 %v899, %v1667
  %v1716 = vmul.f32 %v900, %v1668
  %v1717 = vmul.f32 %v901, %v1669
  %v1718 = vmul.f32 %v902, %v1670
  %v1719 = vmul.f32 %v903, %v1671
  %v1720 = vmul.f32 %v904, %v1672
  %v1721 = vmul.f32 %v905, %v1673
  %v1722 = vmul.f32 %v906, %v1674
  %v1723 = vmul.f32 %v907, %v1675
  %v1724 = vmul.f32 %v908, %v1676
  %v1725 = vmul.f32 %v909, %v1677
  %v1726 = vmul.f32 %v910, %v1678
  %v1727 = vmul.f32 %v911, %v1679
  %v1728 = vmul.f32 %v912, %v1680
  %v1729 = vmul.f32 %v913, %v1681
  %v1730 = vmul.f32 %v914, %v1682
  %v1731 = vmul.f32 %v915, %v1683
  %v1732 = vmul.f32 %v916, %v1684
  %v1733 = vmul.f32 %v917, %v1685
  %v1734 = vmul.f32 %v918, %v1686
  %v1735 = vmul.f32 %v919, %v1687
  %v1736 = vmul.f32 %v920, %v1688
  %v1737 = vmul.f32 %v921, %v1689
  %v1738 = vmul.f32 %v922, %v1690
  %v1739 = vmul.f32 %v923, %v1691
  %v1740 = vmul.f32 %v924, %v1692
  %v1741 = vmul.f32 %v925, %v1693
  %v1742 = vmul.f32 %v926, %v1694
  %v1743 = vmul.f32 %v927, %v1695
  %v1744 = vmul.f32 %v928, %v1696
  %v1745 = vmul.f32 %v929, %v1697
  %v1746 = vmul.f32 %v930, %v1698
  %v1747 = vmul.f32 %v931, %v1699
  %v1748 = vmul.f32 %v932, %v1700
  %v1749 = vmul.f32 %v933, %v1701
  %v1750 = vmul.f32 %v934, %v1702
  %v1751 = vmul.f32 %v935, %v1703
  %v1752 = vmul.f32 %v936, %v1704
  %v1753 = vmul.f32 %v937, %v1705
  %v1754 = vmul.f32 %v938, %v1706
  %v1755 = vmul.f32 %v939, %v1707
  %v1756 = vmul.f32 %v940, %v1708
  %v1757 = vmul.f32 %v941, %v1709
  %v1758 = vmul.f32 %v942, %v1710
  %v1759 = vmul.f32 %v943, %v1711
  %v1760 = vmul.f32 %v1136, %v1712
  %v1761 = vmul.f32 %v1137, %v1713
  %v1762 = vmul.f32 %v1138, %v1714
  %v1763 = vmul.f32 %v1139, %v1715
  %v1764 = vmul.f32 %v1140, %v1716
  %v1765 = vmul.f32 %v1141, %v1717
  %v1766 = vmul.f32 %v1142, %v1718
  %v1767 = vmul.f32 %v1143, %v1719
  %v1768 = vmul.f32 %v1144, %v1720
  %v1769 = vmul.f32 %v1145, %v1721
  %v1770 = vmul.f32 %v1146, %v1722
  %v1771 = vmul.f32 %v1147, %v1723
  %v1772 = vmul.f32 %v1148, %v1724
  %v1773 = vmul.f32 %v1149, %v1725
  %v1774 = vmul.f32 %v1150, %v1726
  %v1775 = vmul.f32 %v1151, %v1727
  %v1776 = vmul.f32 %v1152, %v1728
  %v1777 = vmul.f32 %v1153, %v1729
  %v1778 = vmul.f32 %v1154, %v1730
  %v1779 = vmul.f32 %v1155, %v1731
  %v1780 = vmul.f32 %v1156, %v1732
  %v1781 = vmul.f32 %v1157, %v1733
  %v1782 = vmul.f32 %v1158, %v1734
  %v1783 = vmul.f32 %v1159, %v1735
  %v1784 = vmul.f32 %v1160, %v1736
  %v1785 = vmul.f32 %v1161, %v1737
  %v1786 = vmul.f32 %v1162, %v1738
  %v1787 = vmul.f32 %v1163, %v1739
  %v1788 = vmul.f32 %v1164, %v1740
  %v1789 = vmul.f32 %v1165, %v1741
  %v1790 = vmul.f32 %v1166, %v1742
  %v1791 = vmul.f32 %v1167, %v1743
  %v1792 = vmul.f32 %v1168, %v1744
  %v1793 = vmul.f32 %v1169, %v1745
  %v1794 = vmul.f32 %v1170, %v1746
  %v1795 = vmul.f32 %v1171, %v1747
  %v1796 = vmul.f32 %v1172, %v1748
  %v1797 = vmul.f32 %v1173, %v1749
  %v1798 = vmul.f32 %v1174, %v1750
  %v1799 = vmul.f32 %v1175, %v1751
  %v1800 = vmul.f32 %v1176, %v1752
  %v1801 = vmul.f32 %v1177, %v1753
  %v1802 = vmul.f32 %v1178, %v1754
  %v1803 = vmul.f32 %v1179, %v1755
  %v1804 = vmul.f32 %v1180, %v1756
  %v1805 = vmul.f32 %v1181, %v1757
  %v1806 = vmul.f32 %v1182, %v1758
  %v1807 = vmul.f32 %v1183, %v1759
  %1856 = vrot.lane.b32.xlu0 %v1760, 1
  %v1857 = vpop.permute.xlu0 %1856
  %1858 = vrot.lane.b32.xlu0 %v1761, 1
  %v1859 = vpop.permute.xlu0 %1858
  %1860 = vrot.lane.b32.xlu0 %v1762, 1
  %v1861 = vpop.permute.xlu0 %1860
  %1862 = vrot.lane.b32.xlu0 %v1763, 1
  %v1863 = vpop.permute.xlu0 %1862
  %1864 = vrot.lane.b32.xlu0 %v1764, 1
  %v1865 = vpop.permute.xlu0 %1864
  %1866 = vrot.lane.b32.xlu0 %v1765, 1
  %v1867 = vpop.permute.xlu0 %1866
  %1868 = vrot.lane.b32.xlu0 %v1766, 1
  %v1869 = vpop.permute.xlu0 %1868
  %1870 = vrot.lane.b32.xlu0 %v1767, 1
  %v1871 = vpop.permute.xlu0 %1870
  %1872 = vrot.lane.b32.xlu0 %v1768, 1
  %v1873 = vpop.permute.xlu0 %1872
  %1874 = vrot.lane.b32.xlu0 %v1769, 1
  %v1875 = vpop.permute.xlu0 %1874
  %1876 = vrot.lane.b32.xlu0 %v1770, 1
  %v1877 = vpop.permute.xlu0 %1876
  %1878 = vrot.lane.b32.xlu0 %v1771, 1
  %v1879 = vpop.permute.xlu0 %1878
  %1880 = vrot.lane.b32.xlu0 %v1772, 1
  %v1881 = vpop.permute.xlu0 %1880
  %1882 = vrot.lane.b32.xlu0 %v1773, 1
  %v1883 = vpop.permute.xlu0 %1882
  %1884 = vrot.lane.b32.xlu0 %v1774, 1
  %v1885 = vpop.permute.xlu0 %1884
  %1886 = vrot.lane.b32.xlu0 %v1775, 1
  %v1887 = vpop.permute.xlu0 %1886
  %1888 = vrot.lane.b32.xlu0 %v1776, 1
  %v1889 = vpop.permute.xlu0 %1888
  %1890 = vrot.lane.b32.xlu0 %v1777, 1
  %v1891 = vpop.permute.xlu0 %1890
  %1892 = vrot.lane.b32.xlu0 %v1778, 1
  %v1893 = vpop.permute.xlu0 %1892
  %1894 = vrot.lane.b32.xlu0 %v1779, 1
  %v1895 = vpop.permute.xlu0 %1894
  %1896 = vrot.lane.b32.xlu0 %v1780, 1
  %v1897 = vpop.permute.xlu0 %1896
  %1898 = vrot.lane.b32.xlu0 %v1781, 1
  %v1899 = vpop.permute.xlu0 %1898
  %1900 = vrot.lane.b32.xlu0 %v1782, 1
  %v1901 = vpop.permute.xlu0 %1900
  %1902 = vrot.lane.b32.xlu0 %v1783, 1
  %v1903 = vpop.permute.xlu0 %1902
  %1904 = vrot.lane.b32.xlu0 %v1784, 1
  %v1905 = vpop.permute.xlu0 %1904
  %1906 = vrot.lane.b32.xlu0 %v1785, 1
  %v1907 = vpop.permute.xlu0 %1906
  %1908 = vrot.lane.b32.xlu0 %v1786, 1
  %v1909 = vpop.permute.xlu0 %1908
  %1910 = vrot.lane.b32.xlu0 %v1787, 1
  %v1911 = vpop.permute.xlu0 %1910
  %1912 = vrot.lane.b32.xlu0 %v1788, 1
  %v1913 = vpop.permute.xlu0 %1912
  %1914 = vrot.lane.b32.xlu0 %v1789, 1
  %v1915 = vpop.permute.xlu0 %1914
  %1916 = vrot.lane.b32.xlu0 %v1790, 1
  %v1917 = vpop.permute.xlu0 %1916
  %1918 = vrot.lane.b32.xlu0 %v1791, 1
  %v1919 = vpop.permute.xlu0 %1918
  %1920 = vrot.lane.b32.xlu0 %v1792, 1
  %v1921 = vpop.permute.xlu0 %1920
  %1922 = vrot.lane.b32.xlu0 %v1793, 1
  %v1923 = vpop.permute.xlu0 %1922
  %1924 = vrot.lane.b32.xlu0 %v1794, 1
  %v1925 = vpop.permute.xlu0 %1924
  %1926 = vrot.lane.b32.xlu0 %v1795, 1
  %v1927 = vpop.permute.xlu0 %1926
  %1928 = vrot.lane.b32.xlu0 %v1796, 1
  %v1929 = vpop.permute.xlu0 %1928
  %1930 = vrot.lane.b32.xlu0 %v1797, 1
  %v1931 = vpop.permute.xlu0 %1930
  %1932 = vrot.lane.b32.xlu0 %v1798, 1
  %v1933 = vpop.permute.xlu0 %1932
  %1934 = vrot.lane.b32.xlu0 %v1799, 1
  %v1935 = vpop.permute.xlu0 %1934
  %1936 = vrot.lane.b32.xlu0 %v1800, 1
  %v1937 = vpop.permute.xlu0 %1936
  %1938 = vrot.lane.b32.xlu0 %v1801, 1
  %v1939 = vpop.permute.xlu0 %1938
  %1940 = vrot.lane.b32.xlu0 %v1802, 1
  %v1941 = vpop.permute.xlu0 %1940
  %1942 = vrot.lane.b32.xlu0 %v1803, 1
  %v1943 = vpop.permute.xlu0 %1942
  %1944 = vrot.lane.b32.xlu0 %v1804, 1
  %v1945 = vpop.permute.xlu0 %1944
  %1946 = vrot.lane.b32.xlu0 %v1805, 1
  %v1947 = vpop.permute.xlu0 %1946
  %1948 = vrot.lane.b32.xlu0 %v1806, 1
  %v1949 = vpop.permute.xlu0 %1948
  %1950 = vrot.lane.b32.xlu0 %v1807, 1
  %v1951 = vpop.permute.xlu0 %1950
  %v2000 = vsub.f32 %v896, %v1857
  %v2001 = vsub.f32 %v897, %v1859
  %v2002 = vsub.f32 %v898, %v1861
  %v2003 = vsub.f32 %v899, %v1863
  %v2004 = vsub.f32 %v900, %v1865
  %v2005 = vsub.f32 %v901, %v1867
  %v2006 = vsub.f32 %v902, %v1869
  %v2007 = vsub.f32 %v903, %v1871
  %v2008 = vsub.f32 %v904, %v1873
  %v2009 = vsub.f32 %v905, %v1875
  %v2010 = vsub.f32 %v906, %v1877
  %v2011 = vsub.f32 %v907, %v1879
  %v2012 = vsub.f32 %v908, %v1881
  %v2013 = vsub.f32 %v909, %v1883
  %v2014 = vsub.f32 %v910, %v1885
  %v2015 = vsub.f32 %v911, %v1887
  %v2016 = vsub.f32 %v912, %v1889
  %v2017 = vsub.f32 %v913, %v1891
  %v2018 = vsub.f32 %v914, %v1893
  %v2019 = vsub.f32 %v915, %v1895
  %v2020 = vsub.f32 %v916, %v1897
  %v2021 = vsub.f32 %v917, %v1899
  %v2022 = vsub.f32 %v918, %v1901
  %v2023 = vsub.f32 %v919, %v1903
  %v2024 = vsub.f32 %v920, %v1905
  %v2025 = vsub.f32 %v921, %v1907
  %v2026 = vsub.f32 %v922, %v1909
  %v2027 = vsub.f32 %v923, %v1911
  %v2028 = vsub.f32 %v924, %v1913
  %v2029 = vsub.f32 %v925, %v1915
  %v2030 = vsub.f32 %v926, %v1917
  %v2031 = vsub.f32 %v927, %v1919
  %v2032 = vsub.f32 %v928, %v1921
  %v2033 = vsub.f32 %v929, %v1923
  %v2034 = vsub.f32 %v930, %v1925
  %v2035 = vsub.f32 %v931, %v1927
  %v2036 = vsub.f32 %v932, %v1929
  %v2037 = vsub.f32 %v933, %v1931
  %v2038 = vsub.f32 %v934, %v1933
  %v2039 = vsub.f32 %v935, %v1935
  %v2040 = vsub.f32 %v936, %v1937
  %v2041 = vsub.f32 %v937, %v1939
  %v2042 = vsub.f32 %v938, %v1941
  %v2043 = vsub.f32 %v939, %v1943
  %v2044 = vsub.f32 %v940, %v1945
  %v2045 = vsub.f32 %v941, %v1947
  %v2046 = vsub.f32 %v942, %v1949
  %v2047 = vsub.f32 %v943, %v1951
  %2049 = vset.pattern.permute.xlu0 0
  %2050 = vperm.xlu0 %2049, %v1712
  %v2051 = vpop.permute.xlu0 %2050
  %2054 = vset.pattern.permute.xlu0 0
  %2055 = vperm.xlu0 %2054, %v1713
  %v2056 = vpop.permute.xlu0 %2055
  %2059 = vset.pattern.permute.xlu0 0
  %2060 = vperm.xlu0 %2059, %v1714
  %v2061 = vpop.permute.xlu0 %2060
  %2064 = vset.pattern.permute.xlu0 0
  %2065 = vperm.xlu0 %2064, %v1715
  %v2066 = vpop.permute.xlu0 %2065
  %2069 = vset.pattern.permute.xlu0 0
  %2070 = vperm.xlu0 %2069, %v1716
  %v2071 = vpop.permute.xlu0 %2070
  %2074 = vset.pattern.permute.xlu0 0
  %2075 = vperm.xlu0 %2074, %v1717
  %v2076 = vpop.permute.xlu0 %2075
  %2079 = vset.pattern.permute.xlu0 0
  %2080 = vperm.xlu0 %2079, %v1718
  %v2081 = vpop.permute.xlu0 %2080
  %2084 = vset.pattern.permute.xlu0 0
  %2085 = vperm.xlu0 %2084, %v1719
  %v2086 = vpop.permute.xlu0 %2085
  %2089 = vset.pattern.permute.xlu0 0
  %2090 = vperm.xlu0 %2089, %v1720
  %v2091 = vpop.permute.xlu0 %2090
  %2094 = vset.pattern.permute.xlu0 0
  %2095 = vperm.xlu0 %2094, %v1721
  %v2096 = vpop.permute.xlu0 %2095
  %2099 = vset.pattern.permute.xlu0 0
  %2100 = vperm.xlu0 %2099, %v1722
  %v2101 = vpop.permute.xlu0 %2100
  %2104 = vset.pattern.permute.xlu0 0
  %2105 = vperm.xlu0 %2104, %v1723
  %v2106 = vpop.permute.xlu0 %2105
  %2109 = vset.pattern.permute.xlu0 0
  %2110 = vperm.xlu0 %2109, %v1724
  %v2111 = vpop.permute.xlu0 %2110
  %2114 = vset.pattern.permute.xlu0 0
  %2115 = vperm.xlu0 %2114, %v1725
  %v2116 = vpop.permute.xlu0 %2115
  %2119 = vset.pattern.permute.xlu0 0
  %2120 = vperm.xlu0 %2119, %v1726
  %v2121 = vpop.permute.xlu0 %2120
  %2124 = vset.pattern.permute.xlu0 0
  %2125 = vperm.xlu0 %2124, %v1727
  %v2126 = vpop.permute.xlu0 %2125
  %2129 = vset.pattern.permute.xlu0 0
  %2130 = vperm.xlu0 %2129, %v1728
  %v2131 = vpop.permute.xlu0 %2130
  %2134 = vset.pattern.permute.xlu0 0
  %2135 = vperm.xlu0 %2134, %v1729
  %v2136 = vpop.permute.xlu0 %2135
  %2139 = vset.pattern.permute.xlu0 0
  %2140 = vperm.xlu0 %2139, %v1730
  %v2141 = vpop.permute.xlu0 %2140
  %2144 = vset.pattern.permute.xlu0 0
  %2145 = vperm.xlu0 %2144, %v1731
  %v2146 = vpop.permute.xlu0 %2145
  %2149 = vset.pattern.permute.xlu0 0
  %2150 = vperm.xlu0 %2149, %v1732
  %v2151 = vpop.permute.xlu0 %2150
  %2154 = vset.pattern.permute.xlu0 0
  %2155 = vperm.xlu0 %2154, %v1733
  %v2156 = vpop.permute.xlu0 %2155
  %2159 = vset.pattern.permute.xlu0 0
  %2160 = vperm.xlu0 %2159, %v1734
  %v2161 = vpop.permute.xlu0 %2160
  %2164 = vset.pattern.permute.xlu0 0
  %2165 = vperm.xlu0 %2164, %v1735
  %v2166 = vpop.permute.xlu0 %2165
  %2169 = vset.pattern.permute.xlu0 0
  %2170 = vperm.xlu0 %2169, %v1736
  %v2171 = vpop.permute.xlu0 %2170
  %2174 = vset.pattern.permute.xlu0 0
  %2175 = vperm.xlu0 %2174, %v1737
  %v2176 = vpop.permute.xlu0 %2175
  %2179 = vset.pattern.permute.xlu0 0
  %2180 = vperm.xlu0 %2179, %v1738
  %v2181 = vpop.permute.xlu0 %2180
  %2184 = vset.pattern.permute.xlu0 0
  %2185 = vperm.xlu0 %2184, %v1739
  %v2186 = vpop.permute.xlu0 %2185
  %2189 = vset.pattern.permute.xlu0 0
  %2190 = vperm.xlu0 %2189, %v1740
  %v2191 = vpop.permute.xlu0 %2190
  %2194 = vset.pattern.permute.xlu0 0
  %2195 = vperm.xlu0 %2194, %v1741
  %v2196 = vpop.permute.xlu0 %2195
  %2199 = vset.pattern.permute.xlu0 0
  %2200 = vperm.xlu0 %2199, %v1742
  %v2201 = vpop.permute.xlu0 %2200
  %2204 = vset.pattern.permute.xlu0 0
  %2205 = vperm.xlu0 %2204, %v1743
  %v2206 = vpop.permute.xlu0 %2205
  %2209 = vset.pattern.permute.xlu0 0
  %2210 = vperm.xlu0 %2209, %v1744
  %v2211 = vpop.permute.xlu0 %2210
  %2214 = vset.pattern.permute.xlu0 0
  %2215 = vperm.xlu0 %2214, %v1745
  %v2216 = vpop.permute.xlu0 %2215
  %2219 = vset.pattern.permute.xlu0 0
  %2220 = vperm.xlu0 %2219, %v1746
  %v2221 = vpop.permute.xlu0 %2220
  %2224 = vset.pattern.permute.xlu0 0
  %2225 = vperm.xlu0 %2224, %v1747
  %v2226 = vpop.permute.xlu0 %2225
  %2229 = vset.pattern.permute.xlu0 0
  %2230 = vperm.xlu0 %2229, %v1748
  %v2231 = vpop.permute.xlu0 %2230
  %2234 = vset.pattern.permute.xlu0 0
  %2235 = vperm.xlu0 %2234, %v1749
  %v2236 = vpop.permute.xlu0 %2235
  %2239 = vset.pattern.permute.xlu0 0
  %2240 = vperm.xlu0 %2239, %v1750
  %v2241 = vpop.permute.xlu0 %2240
  %2244 = vset.pattern.permute.xlu0 0
  %2245 = vperm.xlu0 %2244, %v1751
  %v2246 = vpop.permute.xlu0 %2245
  %2249 = vset.pattern.permute.xlu0 0
  %2250 = vperm.xlu0 %2249, %v1752
  %v2251 = vpop.permute.xlu0 %2250
  %2254 = vset.pattern.permute.xlu0 0
  %2255 = vperm.xlu0 %2254, %v1753
  %v2256 = vpop.permute.xlu0 %2255
  %2259 = vset.pattern.permute.xlu0 0
  %2260 = vperm.xlu0 %2259, %v1754
  %v2261 = vpop.permute.xlu0 %2260
  %2264 = vset.pattern.permute.xlu0 0
  %2265 = vperm.xlu0 %2264, %v1755
  %v2266 = vpop.permute.xlu0 %2265
  %2269 = vset.pattern.permute.xlu0 0
  %2270 = vperm.xlu0 %2269, %v1756
  %v2271 = vpop.permute.xlu0 %2270
  %2274 = vset.pattern.permute.xlu0 0
  %2275 = vperm.xlu0 %2274, %v1757
  %v2276 = vpop.permute.xlu0 %2275
  %2279 = vset.pattern.permute.xlu0 0
  %2280 = vperm.xlu0 %2279, %v1758
  %v2281 = vpop.permute.xlu0 %2280
  %2284 = vset.pattern.permute.xlu0 0
  %2285 = vperm.xlu0 %2284, %v1759
  %v2286 = vpop.permute.xlu0 %2285
  %v2288 = vmul.f32 %v658, %v2051
  %v2289 = vmul.f32 %v660, %v2051
  %v2290 = vmul.f32 %v662, %v2056
  %v2291 = vmul.f32 %v664, %v2056
  %v2292 = vmul.f32 %v668, %v2061
  %v2293 = vmul.f32 %v670, %v2061
  %v2294 = vmul.f32 %v672, %v2066
  %v2295 = vmul.f32 %v674, %v2066
  %v2296 = vmul.f32 %v678, %v2071
  %v2297 = vmul.f32 %v680, %v2071
  %v2298 = vmul.f32 %v682, %v2076
  %v2299 = vmul.f32 %v684, %v2076
  %v2300 = vmul.f32 %v688, %v2081
  %v2301 = vmul.f32 %v690, %v2081
  %v2302 = vmul.f32 %v692, %v2086
  %v2303 = vmul.f32 %v694, %v2086
  %v2304 = vmul.f32 %v698, %v2091
  %v2305 = vmul.f32 %v700, %v2091
  %v2306 = vmul.f32 %v702, %v2096
  %v2307 = vmul.f32 %v704, %v2096
  %v2308 = vmul.f32 %v708, %v2101
  %v2309 = vmul.f32 %v710, %v2101
  %v2310 = vmul.f32 %v712, %v2106
  %v2311 = vmul.f32 %v714, %v2106
  %v2312 = vmul.f32 %v718, %v2111
  %v2313 = vmul.f32 %v720, %v2111
  %v2314 = vmul.f32 %v722, %v2116
  %v2315 = vmul.f32 %v724, %v2116
  %v2316 = vmul.f32 %v728, %v2121
  %v2317 = vmul.f32 %v730, %v2121
  %v2318 = vmul.f32 %v732, %v2126
  %v2319 = vmul.f32 %v734, %v2126
  %v2320 = vmul.f32 %v738, %v2131
  %v2321 = vmul.f32 %v740, %v2131
  %v2322 = vmul.f32 %v742, %v2136
  %v2323 = vmul.f32 %v744, %v2136
  %v2324 = vmul.f32 %v748, %v2141
  %v2325 = vmul.f32 %v750, %v2141
  %v2326 = vmul.f32 %v752, %v2146
  %v2327 = vmul.f32 %v754, %v2146
  %v2328 = vmul.f32 %v758, %v2151
  %v2329 = vmul.f32 %v760, %v2151
  %v2330 = vmul.f32 %v762, %v2156
  %v2331 = vmul.f32 %v764, %v2156
  %v2332 = vmul.f32 %v768, %v2161
  %v2333 = vmul.f32 %v770, %v2161
  %v2334 = vmul.f32 %v772, %v2166
  %v2335 = vmul.f32 %v774, %v2166
  %v2336 = vmul.f32 %v778, %v2171
  %v2337 = vmul.f32 %v780, %v2171
  %v2338 = vmul.f32 %v782, %v2176
  %v2339 = vmul.f32 %v784, %v2176
  %v2340 = vmul.f32 %v788, %v2181
  %v2341 = vmul.f32 %v790, %v2181
  %v2342 = vmul.f32 %v792, %v2186
  %v2343 = vmul.f32 %v794, %v2186
  %v2344 = vmul.f32 %v798, %v2191
  %v2345 = vmul.f32 %v800, %v2191
  %v2346 = vmul.f32 %v802, %v2196
  %v2347 = vmul.f32 %v804, %v2196
  %v2348 = vmul.f32 %v808, %v2201
  %v2349 = vmul.f32 %v810, %v2201
  %v2350 = vmul.f32 %v812, %v2206
  %v2351 = vmul.f32 %v814, %v2206
  %v2352 = vmul.f32 %v818, %v2211
  %v2353 = vmul.f32 %v820, %v2211
  %v2354 = vmul.f32 %v822, %v2216
  %v2355 = vmul.f32 %v824, %v2216
  %v2356 = vmul.f32 %v828, %v2221
  %v2357 = vmul.f32 %v830, %v2221
  %v2358 = vmul.f32 %v832, %v2226
  %v2359 = vmul.f32 %v834, %v2226
  %v2360 = vmul.f32 %v838, %v2231
  %v2361 = vmul.f32 %v840, %v2231
  %v2362 = vmul.f32 %v842, %v2236
  %v2363 = vmul.f32 %v844, %v2236
  %v2364 = vmul.f32 %v848, %v2241
  %v2365 = vmul.f32 %v850, %v2241
  %v2366 = vmul.f32 %v852, %v2246
  %v2367 = vmul.f32 %v854, %v2246
  %v2368 = vmul.f32 %v858, %v2251
  %v2369 = vmul.f32 %v860, %v2251
  %v2370 = vmul.f32 %v862, %v2256
  %v2371 = vmul.f32 %v864, %v2256
  %v2372 = vmul.f32 %v868, %v2261
  %v2373 = vmul.f32 %v870, %v2261
  %v2374 = vmul.f32 %v872, %v2266
  %v2375 = vmul.f32 %v874, %v2266
  %v2376 = vmul.f32 %v878, %v2271
  %v2377 = vmul.f32 %v880, %v2271
  %v2378 = vmul.f32 %v882, %v2276
  %v2379 = vmul.f32 %v884, %v2276
  %v2380 = vmul.f32 %v888, %v2281
  %v2381 = vmul.f32 %v890, %v2281
  %v2382 = vmul.f32 %v892, %v2286
  %v2383 = vmul.f32 %v894, %v2286
  %2385 = vset.pattern.permute.xlu0 1
  %2386 = vperm.xlu0 %2385, %v2000
  %v2387 = vpop.permute.xlu0 %2386
  %2390 = vset.pattern.permute.xlu0 1
  %2391 = vperm.xlu0 %2390, %v2001
  %v2392 = vpop.permute.xlu0 %2391
  %2395 = vset.pattern.permute.xlu0 1
  %2396 = vperm.xlu0 %2395, %v2002
  %v2397 = vpop.permute.xlu0 %2396
  %2400 = vset.pattern.permute.xlu0 1
  %2401 = vperm.xlu0 %2400, %v2003
  %v2402 = vpop.permute.xlu0 %2401
  %2405 = vset.pattern.permute.xlu0 1
  %2406 = vperm.xlu0 %2405, %v2004
  %v2407 = vpop.permute.xlu0 %2406
  %2410 = vset.pattern.permute.xlu0 1
  %2411 = vperm.xlu0 %2410, %v2005
  %v2412 = vpop.permute.xlu0 %2411
  %2415 = vset.pattern.permute.xlu0 1
  %2416 = vperm.xlu0 %2415, %v2006
  %v2417 = vpop.permute.xlu0 %2416
  %2420 = vset.pattern.permute.xlu0 1
  %2421 = vperm.xlu0 %2420, %v2007
  %v2422 = vpop.permute.xlu0 %2421
  %2425 = vset.pattern.permute.xlu0 1
  %2426 = vperm.xlu0 %2425, %v2008
  %v2427 = vpop.permute.xlu0 %2426
  %2430 = vset.pattern.permute.xlu0 1
  %2431 = vperm.xlu0 %2430, %v2009
  %v2432 = vpop.permute.xlu0 %2431
  %2435 = vset.pattern.permute.xlu0 1
  %2436 = vperm.xlu0 %2435, %v2010
  %v2437 = vpop.permute.xlu0 %2436
  %2440 = vset.pattern.permute.xlu0 1
  %2441 = vperm.xlu0 %2440, %v2011
  %v2442 = vpop.permute.xlu0 %2441
  %2445 = vset.pattern.permute.xlu0 1
  %2446 = vperm.xlu0 %2445, %v2012
  %v2447 = vpop.permute.xlu0 %2446
  %2450 = vset.pattern.permute.xlu0 1
  %2451 = vperm.xlu0 %2450, %v2013
  %v2452 = vpop.permute.xlu0 %2451
  %2455 = vset.pattern.permute.xlu0 1
  %2456 = vperm.xlu0 %2455, %v2014
  %v2457 = vpop.permute.xlu0 %2456
  %2460 = vset.pattern.permute.xlu0 1
  %2461 = vperm.xlu0 %2460, %v2015
  %v2462 = vpop.permute.xlu0 %2461
  %2465 = vset.pattern.permute.xlu0 1
  %2466 = vperm.xlu0 %2465, %v2016
  %v2467 = vpop.permute.xlu0 %2466
  %2470 = vset.pattern.permute.xlu0 1
  %2471 = vperm.xlu0 %2470, %v2017
  %v2472 = vpop.permute.xlu0 %2471
  %2475 = vset.pattern.permute.xlu0 1
  %2476 = vperm.xlu0 %2475, %v2018
  %v2477 = vpop.permute.xlu0 %2476
  %2480 = vset.pattern.permute.xlu0 1
  %2481 = vperm.xlu0 %2480, %v2019
  %v2482 = vpop.permute.xlu0 %2481
  %2485 = vset.pattern.permute.xlu0 1
  %2486 = vperm.xlu0 %2485, %v2020
  %v2487 = vpop.permute.xlu0 %2486
  %2490 = vset.pattern.permute.xlu0 1
  %2491 = vperm.xlu0 %2490, %v2021
  %v2492 = vpop.permute.xlu0 %2491
  %2495 = vset.pattern.permute.xlu0 1
  %2496 = vperm.xlu0 %2495, %v2022
  %v2497 = vpop.permute.xlu0 %2496
  %2500 = vset.pattern.permute.xlu0 1
  %2501 = vperm.xlu0 %2500, %v2023
  %v2502 = vpop.permute.xlu0 %2501
  %2505 = vset.pattern.permute.xlu0 1
  %2506 = vperm.xlu0 %2505, %v2024
  %v2507 = vpop.permute.xlu0 %2506
  %2510 = vset.pattern.permute.xlu0 1
  %2511 = vperm.xlu0 %2510, %v2025
  %v2512 = vpop.permute.xlu0 %2511
  %2515 = vset.pattern.permute.xlu0 1
  %2516 = vperm.xlu0 %2515, %v2026
  %v2517 = vpop.permute.xlu0 %2516
  %2520 = vset.pattern.permute.xlu0 1
  %2521 = vperm.xlu0 %2520, %v2027
  %v2522 = vpop.permute.xlu0 %2521
  %2525 = vset.pattern.permute.xlu0 1
  %2526 = vperm.xlu0 %2525, %v2028
  %v2527 = vpop.permute.xlu0 %2526
  %2530 = vset.pattern.permute.xlu0 1
  %2531 = vperm.xlu0 %2530, %v2029
  %v2532 = vpop.permute.xlu0 %2531
  %2535 = vset.pattern.permute.xlu0 1
  %2536 = vperm.xlu0 %2535, %v2030
  %v2537 = vpop.permute.xlu0 %2536
  %2540 = vset.pattern.permute.xlu0 1
  %2541 = vperm.xlu0 %2540, %v2031
  %v2542 = vpop.permute.xlu0 %2541
  %2545 = vset.pattern.permute.xlu0 1
  %2546 = vperm.xlu0 %2545, %v2032
  %v2547 = vpop.permute.xlu0 %2546
  %2550 = vset.pattern.permute.xlu0 1
  %2551 = vperm.xlu0 %2550, %v2033
  %v2552 = vpop.permute.xlu0 %2551
  %2555 = vset.pattern.permute.xlu0 1
  %2556 = vperm.xlu0 %2555, %v2034
  %v2557 = vpop.permute.xlu0 %2556
  %2560 = vset.pattern.permute.xlu0 1
  %2561 = vperm.xlu0 %2560, %v2035
  %v2562 = vpop.permute.xlu0 %2561
  %2565 = vset.pattern.permute.xlu0 1
  %2566 = vperm.xlu0 %2565, %v2036
  %v2567 = vpop.permute.xlu0 %2566
  %2570 = vset.pattern.permute.xlu0 1
  %2571 = vperm.xlu0 %2570, %v2037
  %v2572 = vpop.permute.xlu0 %2571
  %2575 = vset.pattern.permute.xlu0 1
  %2576 = vperm.xlu0 %2575, %v2038
  %v2577 = vpop.permute.xlu0 %2576
  %2580 = vset.pattern.permute.xlu0 1
  %2581 = vperm.xlu0 %2580, %v2039
  %v2582 = vpop.permute.xlu0 %2581
  %2585 = vset.pattern.permute.xlu0 1
  %2586 = vperm.xlu0 %2585, %v2040
  %v2587 = vpop.permute.xlu0 %2586
  %2590 = vset.pattern.permute.xlu0 1
  %2591 = vperm.xlu0 %2590, %v2041
  %v2592 = vpop.permute.xlu0 %2591
  %2595 = vset.pattern.permute.xlu0 1
  %2596 = vperm.xlu0 %2595, %v2042
  %v2597 = vpop.permute.xlu0 %2596
  %2600 = vset.pattern.permute.xlu0 1
  %2601 = vperm.xlu0 %2600, %v2043
  %v2602 = vpop.permute.xlu0 %2601
  %2605 = vset.pattern.permute.xlu0 1
  %2606 = vperm.xlu0 %2605, %v2044
  %v2607 = vpop.permute.xlu0 %2606
  %2610 = vset.pattern.permute.xlu0 1
  %2611 = vperm.xlu0 %2610, %v2045
  %v2612 = vpop.permute.xlu0 %2611
  %2615 = vset.pattern.permute.xlu0 1
  %2616 = vperm.xlu0 %2615, %v2046
  %v2617 = vpop.permute.xlu0 %2616
  %2620 = vset.pattern.permute.xlu0 1
  %2621 = vperm.xlu0 %2620, %v2047
  %v2622 = vpop.permute.xlu0 %2621
  %v2624 = vadd.f32 %v2288, %v2387
  %v2625 = vadd.f32 %v2289, %v2387
  %v2626 = vadd.f32 %v2290, %v2392
  %v2627 = vadd.f32 %v2291, %v2392
  %v2628 = vadd.f32 %v2292, %v2397
  %v2629 = vadd.f32 %v2293, %v2397
  %v2630 = vadd.f32 %v2294, %v2402
  %v2631 = vadd.f32 %v2295, %v2402
  %v2632 = vadd.f32 %v2296, %v2407
  %v2633 = vadd.f32 %v2297, %v2407
  %v2634 = vadd.f32 %v2298, %v2412
  %v2635 = vadd.f32 %v2299, %v2412
  %v2636 = vadd.f32 %v2300, %v2417
  %v2637 = vadd.f32 %v2301, %v2417
  %v2638 = vadd.f32 %v2302, %v2422
  %v2639 = vadd.f32 %v2303, %v2422
  %v2640 = vadd.f32 %v2304, %v2427
  %v2641 = vadd.f32 %v2305, %v2427
  %v2642 = vadd.f32 %v2306, %v2432
  %v2643 = vadd.f32 %v2307, %v2432
  %v2644 = vadd.f32 %v2308, %v2437
  %v2645 = vadd.f32 %v2309, %v2437
  %v2646 = vadd.f32 %v2310, %v2442
  %v2647 = vadd.f32 %v2311, %v2442
  %v2648 = vadd.f32 %v2312, %v2447
  %v2649 = vadd.f32 %v2313, %v2447
  %v2650 = vadd.f32 %v2314, %v2452
  %v2651 = vadd.f32 %v2315, %v2452
  %v2652 = vadd.f32 %v2316, %v2457
  %v2653 = vadd.f32 %v2317, %v2457
  %v2654 = vadd.f32 %v2318, %v2462
  %v2655 = vadd.f32 %v2319, %v2462
  %v2656 = vadd.f32 %v2320, %v2467
  %v2657 = vadd.f32 %v2321, %v2467
  %v2658 = vadd.f32 %v2322, %v2472
  %v2659 = vadd.f32 %v2323, %v2472
  %v2660 = vadd.f32 %v2324, %v2477
  %v2661 = vadd.f32 %v2325, %v2477
  %v2662 = vadd.f32 %v2326, %v2482
  %v2663 = vadd.f32 %v2327, %v2482
  %v2664 = vadd.f32 %v2328, %v2487
  %v2665 = vadd.f32 %v2329, %v2487
  %v2666 = vadd.f32 %v2330, %v2492
  %v2667 = vadd.f32 %v2331, %v2492
  %v2668 = vadd.f32 %v2332, %v2497
  %v2669 = vadd.f32 %v2333, %v2497
  %v2670 = vadd.f32 %v2334, %v2502
  %v2671 = vadd.f32 %v2335, %v2502
  %v2672 = vadd.f32 %v2336, %v2507
  %v2673 = vadd.f32 %v2337, %v2507
  %v2674 = vadd.f32 %v2338, %v2512
  %v2675 = vadd.f32 %v2339, %v2512
  %v2676 = vadd.f32 %v2340, %v2517
  %v2677 = vadd.f32 %v2341, %v2517
  %v2678 = vadd.f32 %v2342, %v2522
  %v2679 = vadd.f32 %v2343, %v2522
  %v2680 = vadd.f32 %v2344, %v2527
  %v2681 = vadd.f32 %v2345, %v2527
  %v2682 = vadd.f32 %v2346, %v2532
  %v2683 = vadd.f32 %v2347, %v2532
  %v2684 = vadd.f32 %v2348, %v2537
  %v2685 = vadd.f32 %v2349, %v2537
  %v2686 = vadd.f32 %v2350, %v2542
  %v2687 = vadd.f32 %v2351, %v2542
  %v2688 = vadd.f32 %v2352, %v2547
  %v2689 = vadd.f32 %v2353, %v2547
  %v2690 = vadd.f32 %v2354, %v2552
  %v2691 = vadd.f32 %v2355, %v2552
  %v2692 = vadd.f32 %v2356, %v2557
  %v2693 = vadd.f32 %v2357, %v2557
  %v2694 = vadd.f32 %v2358, %v2562
  %v2695 = vadd.f32 %v2359, %v2562
  %v2696 = vadd.f32 %v2360, %v2567
  %v2697 = vadd.f32 %v2361, %v2567
  %v2698 = vadd.f32 %v2362, %v2572
  %v2699 = vadd.f32 %v2363, %v2572
  %v2700 = vadd.f32 %v2364, %v2577
  %v2701 = vadd.f32 %v2365, %v2577
  %v2702 = vadd.f32 %v2366, %v2582
  %v2703 = vadd.f32 %v2367, %v2582
  %v2704 = vadd.f32 %v2368, %v2587
  %v2705 = vadd.f32 %v2369, %v2587
  %v2706 = vadd.f32 %v2370, %v2592
  %v2707 = vadd.f32 %v2371, %v2592
  %v2708 = vadd.f32 %v2372, %v2597
  %v2709 = vadd.f32 %v2373, %v2597
  %v2710 = vadd.f32 %v2374, %v2602
  %v2711 = vadd.f32 %v2375, %v2602
  %v2712 = vadd.f32 %v2376, %v2607
  %v2713 = vadd.f32 %v2377, %v2607
  %v2714 = vadd.f32 %v2378, %v2612
  %v2715 = vadd.f32 %v2379, %v2612
  %v2716 = vadd.f32 %v2380, %v2617
  %v2717 = vadd.f32 %v2381, %v2617
  %v2718 = vadd.f32 %v2382, %v2622
  %v2719 = vadd.f32 %v2383, %v2622
  %2720 = vst [vmem:[%s5] sm:$0xff] %v2624
  %2721 = vst.msk [vmem:[%s5 + $0x8] sm:$0xff] %vm61, %v2625
  %2722 = vst [vmem:[%s5 + $0x10] sm:$0xff] %v2626
  %2723 = vst.msk [vmem:[%s5 + $0x18] sm:$0xff] %vm61, %v2627
  %2724 = vst [vmem:[%s5 + $0x20] sm:$0xff] %v2628
  %2725 = vst.msk [vmem:[%s5 + $0x28] sm:$0xff] %vm61, %v2629
  %2726 = vst [vmem:[%s5 + $0x30] sm:$0xff] %v2630
  %2727 = vst.msk [vmem:[%s5 + $0x38] sm:$0xff] %vm61, %v2631
  %2728 = vst [vmem:[%s5 + $0x40] sm:$0xff] %v2632
  %2729 = vst.msk [vmem:[%s5 + $0x48] sm:$0xff] %vm61, %v2633
  %2730 = vst [vmem:[%s5 + $0x50] sm:$0xff] %v2634
  %2731 = vst.msk [vmem:[%s5 + $0x58] sm:$0xff] %vm61, %v2635
  %2732 = vst [vmem:[%s5 + $0x60] sm:$0xff] %v2636
  %2733 = vst.msk [vmem:[%s5 + $0x68] sm:$0xff] %vm61, %v2637
  %2734 = vst [vmem:[%s5 + $0x70] sm:$0xff] %v2638
  %2735 = vst.msk [vmem:[%s5 + $0x78] sm:$0xff] %vm61, %v2639
  %2736 = vst [vmem:[%s5 + $0x80] sm:$0xff] %v2640
  %2737 = vst.msk [vmem:[%s5 + $0x88] sm:$0xff] %vm61, %v2641
  %2738 = vst [vmem:[%s5 + $0x90] sm:$0xff] %v2642
  %2739 = vst.msk [vmem:[%s5 + $0x98] sm:$0xff] %vm61, %v2643
  %2740 = vst [vmem:[%s5 + $0xa0] sm:$0xff] %v2644
  %2741 = vst.msk [vmem:[%s5 + $0xa8] sm:$0xff] %vm61, %v2645
  %2742 = vst [vmem:[%s5 + $0xb0] sm:$0xff] %v2646
  %2743 = vst.msk [vmem:[%s5 + $0xb8] sm:$0xff] %vm61, %v2647
  %2744 = vst [vmem:[%s5 + $0xc0] sm:$0xff] %v2648
  %2745 = vst.msk [vmem:[%s5 + $0xc8] sm:$0xff] %vm61, %v2649
  %2746 = vst [vmem:[%s5 + $0xd0] sm:$0xff] %v2650
  %2747 = vst.msk [vmem:[%s5 + $0xd8] sm:$0xff] %vm61, %v2651
  %2748 = vst [vmem:[%s5 + $0xe0] sm:$0xff] %v2652
  %2749 = vst.msk [vmem:[%s5 + $0xe8] sm:$0xff] %vm61, %v2653
  %2750 = vst [vmem:[%s5 + $0xf0] sm:$0xff] %v2654
  %2751 = vst.msk [vmem:[%s5 + $0xf8] sm:$0xff] %vm61, %v2655
  %2752 = vst [vmem:[%s5 + $0x100] sm:$0xff] %v2656
  %2753 = vst.msk [vmem:[%s5 + $0x108] sm:$0xff] %vm61, %v2657
  %2754 = vst [vmem:[%s5 + $0x110] sm:$0xff] %v2658
  %2755 = vst.msk [vmem:[%s5 + $0x118] sm:$0xff] %vm61, %v2659
  %2756 = vst [vmem:[%s5 + $0x120] sm:$0xff] %v2660
  %2757 = vst.msk [vmem:[%s5 + $0x128] sm:$0xff] %vm61, %v2661
  %2758 = vst [vmem:[%s5 + $0x130] sm:$0xff] %v2662
  %2759 = vst.msk [vmem:[%s5 + $0x138] sm:$0xff] %vm61, %v2663
  %2760 = vst [vmem:[%s5 + $0x140] sm:$0xff] %v2664
  %2761 = vst.msk [vmem:[%s5 + $0x148] sm:$0xff] %vm61, %v2665
  %2762 = vst [vmem:[%s5 + $0x150] sm:$0xff] %v2666
  %2763 = vst.msk [vmem:[%s5 + $0x158] sm:$0xff] %vm61, %v2667
  %2764 = vst [vmem:[%s5 + $0x160] sm:$0xff] %v2668
  %2765 = vst.msk [vmem:[%s5 + $0x168] sm:$0xff] %vm61, %v2669
  %2766 = vst [vmem:[%s5 + $0x170] sm:$0xff] %v2670
  %2767 = vst.msk [vmem:[%s5 + $0x178] sm:$0xff] %vm61, %v2671
  %2768 = vst [vmem:[%s5 + $0x180] sm:$0xff] %v2672
  %2769 = vst.msk [vmem:[%s5 + $0x188] sm:$0xff] %vm61, %v2673
  %2770 = vst [vmem:[%s5 + $0x190] sm:$0xff] %v2674
  %2771 = vst.msk [vmem:[%s5 + $0x198] sm:$0xff] %vm61, %v2675
  %2772 = vst [vmem:[%s5 + $0x1a0] sm:$0xff] %v2676
  %2773 = vst.msk [vmem:[%s5 + $0x1a8] sm:$0xff] %vm61, %v2677
  %2774 = vst [vmem:[%s5 + $0x1b0] sm:$0xff] %v2678
  %2775 = vst.msk [vmem:[%s5 + $0x1b8] sm:$0xff] %vm61, %v2679
  %2776 = vst [vmem:[%s5 + $0x1c0] sm:$0xff] %v2680
  %2777 = vst.msk [vmem:[%s5 + $0x1c8] sm:$0xff] %vm61, %v2681
  %2778 = vst [vmem:[%s5 + $0x1d0] sm:$0xff] %v2682
  %2779 = vst.msk [vmem:[%s5 + $0x1d8] sm:$0xff] %vm61, %v2683
  %2780 = vst [vmem:[%s5 + $0x1e0] sm:$0xff] %v2684
  %2781 = vst.msk [vmem:[%s5 + $0x1e8] sm:$0xff] %vm61, %v2685
  %2782 = vst [vmem:[%s5 + $0x1f0] sm:$0xff] %v2686
  %2783 = vst.msk [vmem:[%s5 + $0x1f8] sm:$0xff] %vm61, %v2687
  %2784 = vst [vmem:[%s5 + $0x200] sm:$0xff] %v2688
  %2785 = vst.msk [vmem:[%s5 + $0x208] sm:$0xff] %vm61, %v2689
  %2786 = vst [vmem:[%s5 + $0x210] sm:$0xff] %v2690
  %2787 = vst.msk [vmem:[%s5 + $0x218] sm:$0xff] %vm61, %v2691
  %2788 = vst [vmem:[%s5 + $0x220] sm:$0xff] %v2692
  %2789 = vst.msk [vmem:[%s5 + $0x228] sm:$0xff] %vm61, %v2693
  %2790 = vst [vmem:[%s5 + $0x230] sm:$0xff] %v2694
  %2791 = vst.msk [vmem:[%s5 + $0x238] sm:$0xff] %vm61, %v2695
  %2792 = vst [vmem:[%s5 + $0x240] sm:$0xff] %v2696
  %2793 = vst.msk [vmem:[%s5 + $0x248] sm:$0xff] %vm61, %v2697
  %2794 = vst [vmem:[%s5 + $0x250] sm:$0xff] %v2698
  %2795 = vst.msk [vmem:[%s5 + $0x258] sm:$0xff] %vm61, %v2699
  %2796 = vst [vmem:[%s5 + $0x260] sm:$0xff] %v2700
  %2797 = vst.msk [vmem:[%s5 + $0x268] sm:$0xff] %vm61, %v2701
  %2798 = vst [vmem:[%s5 + $0x270] sm:$0xff] %v2702
  %2799 = vst.msk [vmem:[%s5 + $0x278] sm:$0xff] %vm61, %v2703
  %2800 = vst [vmem:[%s5 + $0x280] sm:$0xff] %v2704
  %2801 = vst.msk [vmem:[%s5 + $0x288] sm:$0xff] %vm61, %v2705
  %2802 = vst [vmem:[%s5 + $0x290] sm:$0xff] %v2706
  %2803 = vst.msk [vmem:[%s5 + $0x298] sm:$0xff] %vm61, %v2707
  %2804 = vst [vmem:[%s5 + $0x2a0] sm:$0xff] %v2708
  %2805 = vst.msk [vmem:[%s5 + $0x2a8] sm:$0xff] %vm61, %v2709
  %2806 = vst [vmem:[%s5 + $0x2b0] sm:$0xff] %v2710
  %2807 = vst.msk [vmem:[%s5 + $0x2b8] sm:$0xff] %vm61, %v2711
  %2808 = vst [vmem:[%s5 + $0x2c0] sm:$0xff] %v2712
  %2809 = vst.msk [vmem:[%s5 + $0x2c8] sm:$0xff] %vm61, %v2713
  %2810 = vst [vmem:[%s5 + $0x2d0] sm:$0xff] %v2714
  %2811 = vst.msk [vmem:[%s5 + $0x2d8] sm:$0xff] %vm61, %v2715
  %2812 = vst [vmem:[%s5 + $0x2e0] sm:$0xff] %v2716
  %2813 = vst.msk [vmem:[%s5 + $0x2e8] sm:$0xff] %vm61, %v2717
  %2814 = vst [vmem:[%s5 + $0x2f0] sm:$0xff] %v2718
  %2815 = vst.msk [vmem:[%s5 + $0x2f8] sm:$0xff] %vm61, %v2719
  // Predicated region
  $region22: #{tpu_custom_call.1} parent=0 // pred_check
    _
  $region23: #{tpu_custom_call.1} parent=0 // pred_check_branch
    %2817 = sbr.rel (0) target = $region25
  $region24: #{tpu_custom_call.1} parent=0 // pred_region
    _
  $region25: #{tpu_custom_call.1} parent=0 // pred_fallthru
    _
  // Predicated region
  $region26: #{tpu_custom_call.1} parent=0 // pred_check
    _
  $region27: #{tpu_custom_call.1} parent=0 // pred_check_branch
    %2819 = sbr.rel (0) target = $region29
  $region28: #{tpu_custom_call.1} parent=0 // pred_region
    _
  $region29: #{tpu_custom_call.1} parent=0 // pred_fallthru
    _

</llo_original>
